<compile_context>
chip_gen: v7x
topology: tpu7x:2x2x1
jax: 0.10.0
libtpu: 0.0.40
codegen_flags: <defaults>
</compile_context>

<pallas_src>
import jax
import jax.numpy as jnp
from jax import lax
from jax.experimental import pallas as pl
from jax.experimental.pallas import tpu as pltpu

# ---------------------------------------------------------------------------
# Hyper-parameters consistent with AttentionXML.__init__
# ---------------------------------------------------------------------------
VOCAB = 50      # vocab_size
EMB = 32        # emb_size
HID = 32        # hidden_size (per LSTM direction)
LAYERS = 1      # layers_num (kernel implements the single-layer case)
LABELS = 16     # labels_num
LINEAR = 32     # linear_size = [LINEAR]  (single hidden linear layer)
PAD = 0         # padding_idx
B, T = 2, 8     # batch, sequence length
D = 2 * HID     # bidirectional hidden size
G8 = 8 * HID    # 256: interleaved gate width (both directions)
VP = 64         # padded vocab rows for the in-kernel one-hot embedding matmul

# ---------------------------------------------------------------------------
# Packed weight-slab row offsets (single (SLAB_ROWS, 256) f32 operand).
# ---------------------------------------------------------------------------
OFF_PROJ = 0                      # (2*VP, G8)  emb @ Wih (fwd rows 0:VP, bwd rows VP:2VP)
OFF_WHH = OFF_PROJ + 2 * VP       # (2*HID, G8) interleaved recurrent weights
OFF_BGATE = OFF_WHH + 2 * HID     # (1, G8)     b_ih + b_hh, both directions
OFF_WATTN = OFF_BGATE + 8         # (2*HID, LABELS)
OFF_W1 = OFF_WATTN + 2 * HID      # (2*HID, LINEAR)
OFF_B1 = OFF_W1 + 2 * HID         # (1, LINEAR)
OFF_WO = OFF_B1 + 8               # (1, LINEAR)
OFF_BO = OFF_WO + 8               # (1, 1)
SLAB_ROWS = OFF_BO + 8            # 352 rows -> ~352 KiB, trivially fits VMEM


# ---------------------------------------------------------------------------
# Fused kernel.
#   slab_ref : (SLAB_ROWS, 256) f32 packed parameters (see offsets above)
#   ids_ref  : (T*B, 2) int32    col 0 = time-major token ids (row = t*B+b),
#                                col 1 = time-REVERSED time-major token ids
#   bias_ref : (B, 1, T) f32     0.0 at real tokens, -1e30 at padding
#   out_ref  : (B, LABELS) f32   logits
# Scratch:
#   xproj_scr: (T*B, 8H) f32     step-aligned gate pre-activations
#   mask_scr : (T*B, 2H) f32     step-aligned packed-sequence masks
#   rnn_scr  : (B, T, 2H) f32    BiLSTM outputs (zeros at padded steps)
# ---------------------------------------------------------------------------
def _attnxml_kernel(slab_ref, ids_ref, bias_ref, out_ref,
                    xproj_scr, mask_scr, rnn_scr):
    f32 = jnp.float32
    H = HID
    TB = T * B
    L = LABELS

    ids = ids_ref[...]                                        # (TB, 2) int32

    # ---- fused embedding gather + input projection (one one-hot matmul) -----
    # slab row v      (< VP): emb[v] @ Wih_fwd, spread into fwd gate columns
    # slab row VP + v        : emb[v] @ Wih_bwd, spread into bwd gate columns
    lane2v = lax.broadcasted_iota(jnp.int32, (TB, 2 * VP), 1)
    target = jnp.where(lane2v < VP, ids[:, 0:1], ids[:, 1:2] + VP)
    onehot = (lane2v == target).astype(f32)                   # (TB, 2*VP): 2 hits/row
    proj_table = slab_ref[OFF_PROJ:OFF_PROJ + 2 * VP, :]      # (2*VP, 8H)
    b_gate = slab_ref[OFF_BGATE:OFF_BGATE + 1, :]             # (1, 8H)
    # row s*B+b: fwd-gate pre-acts at time s | bwd-gate pre-acts at time T-1-s
    xproj_scr[...] = (jnp.dot(onehot, proj_table, preferred_element_type=f32)
                      + b_gate)

    # ---- hoisted packed-sequence masks (step-aligned, broadcast to 2H) ------
    valid_f = (ids[:, 0:1] != PAD).astype(f32)                # (TB, 1)
    valid_r = (ids[:, 1:2] != PAD).astype(f32)                # (TB, 1)
    lane2h = lax.broadcasted_iota(jnp.int32, (TB, 2 * H), 1)
    mask_scr[...] = jnp.where(lane2h < H, valid_f, valid_r)   # (TB, 2H)

    # ---- merged bidirectional recurrence: ONE matmul per step ----------------
    # gate column layout (blocks of H): [i_f,i_b | f_f,f_b | g_f,g_b | o_f,o_b]
    whh = slab_ref[OFF_WHH:OFF_WHH + 2 * H, :]                # (2H, 8H)
    h_cat = jnp.zeros((B, 2 * H), f32)                        # [h_f | h_b]
    c_cat = jnp.zeros((B, 2 * H), f32)                        # LSTM init state = 0
    for s in range(T):                                        # static unroll, T=8
        tf = s
        tb = T - 1 - s
        x_s = xproj_scr[s * B:(s + 1) * B, :]                 # (B, 8H) vld
        g = x_s + jnp.dot(h_cat, whh, preferred_element_type=f32)
        sg = jax.nn.sigmoid(g)                                # one full-width sigmoid
        tg = jnp.tanh(g)                                      # one full-width tanh
        c_new = sg[:, 2 * H:4 * H] * c_cat + sg[:, 0:2 * H] * tg[:, 4 * H:6 * H]
        h_new = sg[:, 6 * H:8 * H] * jnp.tanh(c_new)
        m = mask_scr[s * B:(s + 1) * B, :]                    # (B, 2H) step mask
        h_cat = jnp.where(m > 0.5, h_new, h_cat)              # freeze over padding
        c_cat = jnp.where(m > 0.5, c_new, c_cat)
        h_out = h_cat * m                                     # pad_packed_sequence: 0 at pads
        rnn_scr[:, tf:tf + 1, 0:H] = h_out[:, 0:H].reshape(B, 1, H)
        rnn_scr[:, tb:tb + 1, H:2 * H] = h_out[:, H:2 * H].reshape(B, 1, H)

    # ---- MLAttention: per-label masked softmax over time (batched) ----------
    x = rnn_scr[...]                                          # (B, T, 2H)
    x2 = x.reshape(B * T, 2 * H)                              # leading-dim merge (free)
    w_attn = slab_ref[OFF_WATTN:OFF_WATTN + 2 * H, 0:L]       # (2H, L)
    scores = jnp.dot(x2, w_attn, preferred_element_type=f32)  # (B*T, L)
    scores = jnp.swapaxes(scores.reshape(B, T, L), 1, 2)      # (B, L, T), like torch .transpose(1,2)
    scores = scores + bias_ref[...]                           # additive -1e30 at pads
    scores = scores - jnp.max(scores, axis=-1, keepdims=True)
    p = jnp.exp(scores)
    # approx reciprocal (~2^-12 rel. error) -- not bit-exact vs. torch softmax.
    p = p * pl.reciprocal(jnp.sum(p, axis=-1, keepdims=True), approx=True)
    attn = jnp.einsum('blt,btd->bld', p, x,
                      preferred_element_type=f32)             # (B, L, 2H)

    # ---- MLLinear: Linear(2H, LINEAR) + ReLU, Linear(LINEAR, 1) --------------
    w1 = slab_ref[OFF_W1:OFF_W1 + 2 * H, 0:LINEAR]            # (2H, LINEAR)
    b1 = slab_ref[OFF_B1:OFF_B1 + 1, 0:LINEAR]                # (1, LINEAR)
    wo = slab_ref[OFF_WO:OFF_WO + 1, 0:LINEAR]                # (1, LINEAR)
    bo = slab_ref[OFF_BO:OFF_BO + 1, 0:1]                     # (1, 1)
    hid = jnp.dot(attn.reshape(B * L, 2 * H), w1,
                  preferred_element_type=f32) + b1            # (B*L, LINEAR)
    hid = jnp.maximum(hid, 0.0)
    y = jnp.sum(hid * wo, axis=1, keepdims=True)              # (B*L, 1)
    out_ref[...] = y.reshape(B, L) + bo                       # (B, LABELS) logits


# ---------------------------------------------------------------------------
# Full AttentionXML forward: everything runs inside ONE pallas_call; the
# wrapper only builds the two tiny activation-dependent operands.
# ---------------------------------------------------------------------------
def attention_xml_forward(inputs, params):
    masks = inputs != PAD                                     # (B, T)
    # torch slices to lengths.max(); inputs are built so lengths.max() == T,
    # making that slice a static no-op.
    ids_tb = inputs.T.astype(jnp.int32)                       # (T, B) time-major
    ids2 = jnp.stack([ids_tb.reshape(-1),
                      ids_tb[::-1].reshape(-1)], axis=1)      # (T*B, 2) int32
    attn_bias = jnp.where(masks, 0.0, -1e30).astype(jnp.float32)[:, None, :]  # (B,1,T)

    vmem = pl.BlockSpec(memory_space=pltpu.MemorySpace.VMEM)
    out = pl.pallas_call(
        _attnxml_kernel,
        out_shape=jax.ShapeDtypeStruct((B, LABELS), jnp.float32),
        in_specs=[vmem, vmem, vmem],
        out_specs=vmem,
        scratch_shapes=[
            pltpu.VMEM((T * B, G8), jnp.float32),   # gate pre-activations
            pltpu.VMEM((T * B, D), jnp.float32),    # packed-sequence masks
            pltpu.VMEM((B, T, D), jnp.float32),     # BiLSTM outputs (batch-major)
        ],
    )(params["slab"], ids2, attn_bias)
    # TODO(synk): on v7x (2 TensorCores) add a "parallel" grid axis over batch
    # tiles once the effective batch grows beyond 2; this single invocation
    # occupies one core.
    return out                                                # (B, LABELS)


# ---------------------------------------------------------------------------
# Deterministic parameter initialization (shapes from the module's __init__),
# packed into the single fused-kernel weight slab.
# ---------------------------------------------------------------------------
def init_params(key):
    ks = jax.random.split(key, 12)

    def xavier(k, out_s, in_s):
        bound = (6.0 / (in_s + out_s)) ** 0.5
        return jax.random.uniform(k, (out_s, in_s), jnp.float32, -bound, bound)

    def unif(k, shape, bound):
        return jax.random.uniform(k, shape, jnp.float32, -bound, bound)

    H = HID
    # Embedding table (padding row zeroed, like nn.Embedding(padding_idx=0)).
    emb_table = 0.1 * jax.random.normal(ks[0], (VOCAB, EMB), jnp.float32)
    emb_table = emb_table.at[PAD].set(0.0)
    emb_pad = jnp.zeros((VP, EMB), jnp.float32).at[:VOCAB].set(emb_table)

    s = 1.0 / (H ** 0.5)
    # PyTorch gate order [i, f, g, o]; b = b_ih + b_hh per direction.
    wih_f = unif(ks[1], (4 * H, EMB), s)
    whh_f = unif(ks[2], (4 * H, H), s)
    b_f = unif(ks[3], (4 * H,), s) + unif(ks[4], (4 * H,), s)
    wih_b = unif(ks[5], (4 * H, EMB), s)
    whh_b = unif(ks[6], (4 * H, H), s)
    b_b = unif(ks[7], (4 * H,), s) + unif(ks[8], (4 * H,), s)

    # MLAttention: Linear(2H, LABELS, bias=False), xavier_uniform_.
    w_attn = xavier(ks[9], LABELS, D)                         # (L, 2H)
    # MLLinear: Linear(2H, LINEAR) + ReLU, Linear(LINEAR, 1).
    w1 = xavier(ks[10], LINEAR, D)                            # (LINEAR, 2H)
    b1 = unif(ks[11], (LINEAR,), 1.0 / (D ** 0.5))
    wo = xavier(jax.random.fold_in(key, 100), 1, LINEAR)      # (1, LINEAR)
    bo = unif(jax.random.fold_in(key, 101), (1,), 1.0 / (LINEAR ** 0.5))

    def spread(mat4h, dir_idx):
        # mat4h: (R, 4H) in gate order [i,f,g,o]; place gate k at interleaved
        # columns [(2k+dir)*H : (2k+dir+1)*H] of an (R, 8H) array, 0 elsewhere.
        out = jnp.zeros((mat4h.shape[0], 8 * H), jnp.float32)
        for k in range(4):
            out = out.at[:, (2 * k + dir_idx) * H:(2 * k + dir_idx + 1) * H].set(
                mat4h[:, k * H:(k + 1) * H])
        return out

    # Fused embedding + input-projection tables (one per direction).
    proj_f = spread(emb_pad @ wih_f.T, 0)                     # (VP, 8H)
    proj_b = spread(emb_pad @ wih_b.T, 1)                     # (VP, 8H)
    # Interleaved "block-diagonal" recurrent weights: rows 0:H act on h_f
    # (fwd gate columns), rows H:2H act on h_b (bwd gate columns).
    whh_blk = jnp.concatenate([spread(whh_f.T, 0), spread(whh_b.T, 1)], axis=0)
    b_gate = spread(b_f[None, :], 0) + spread(b_b[None, :], 1)  # (1, 8H)

    slab = jnp.zeros((SLAB_ROWS, G8), jnp.float32)
    slab = slab.at[OFF_PROJ:OFF_PROJ + VP].set(proj_f)
    slab = slab.at[OFF_PROJ + VP:OFF_PROJ + 2 * VP].set(proj_b)
    slab = slab.at[OFF_WHH:OFF_WHH + 2 * H].set(whh_blk)
    slab = slab.at[OFF_BGATE].set(b_gate[0])
    slab = slab.at[OFF_WATTN:OFF_WATTN + 2 * H, 0:LABELS].set(w_attn.T)
    slab = slab.at[OFF_W1:OFF_W1 + 2 * H, 0:LINEAR].set(w1.T)
    slab = slab.at[OFF_B1, 0:LINEAR].set(b1)
    slab = slab.at[OFF_WO, 0:LINEAR].set(wo[0])
    slab = slab.at[OFF_BO, 0].set(bo[0])

    # TODO(synk): multi-layer (layers_num > 1) stacked BiLSTM and deeper
    # MLLinear chains are not unrolled here; kernel covers the single-layer case.
    return {"slab": slab}


if __name__ == "__main__":
    key = jax.random.PRNGKey(0)
    pkey, ikey = jax.random.split(key)
    params = init_params(pkey)

    # Token ids; batch 0 uses the full length so lengths.max() == T.
    inputs = jax.random.randint(ikey, (B, T), 1, VOCAB, dtype=jnp.int32)
    inputs = inputs.at[1, T - 3:].set(PAD)     # batch 1 has 3 trailing pads

    out = jax.jit(attention_xml_forward)(inputs, params)
    out = jax.block_until_ready(out)

    assert out.shape == (B, LABELS), out.shape
    assert bool(jnp.all(jnp.isfinite(out)))
    print("KERNEL_OK")
</pallas_src>

<mosaic_0001>
module attributes {stable_mosaic.version = 11 : i64} {
  func.func @_attnxml_kernel(%arg0: memref<352x256xf32, #tpu.memory_space<vmem>>, %arg1: memref<16x2xi32, #tpu.memory_space<vmem>>, %arg2: memref<2x1x8xf32, #tpu.memory_space<vmem>>, %arg3: memref<2x16xf32, #tpu.memory_space<vmem>>, %arg4: memref<16x256xf32, #tpu.memory_space<vmem>>, %arg5: memref<16x64xf32, #tpu.memory_space<vmem>>, %arg6: memref<2x8x64xf32, #tpu.memory_space<vmem>>) attributes {dimension_semantics = [], scalar_prefetch = 0 : i64, scratch_operands = 3 : i64, tpu.core_type = #tpu.core_type<tc>} {
    %c0 = arith.constant 0 : index
    %c0_0 = arith.constant 0 : index
    %0 = vector.load %arg1[%c0, %c0_0] : memref<16x2xi32, #tpu.memory_space<vmem>>, vector<16x2xi32>
    %1 = tpu.iota {dimensions = array<i32: 1>} : vector<16x128xi32>
    %c64_i32 = arith.constant 64 : i32
    %2 = vector.broadcast %c64_i32 : i32 to vector<16x128xi32>
    %3 = arith.cmpi slt, %1, %2 : vector<16x128xi32>
    %4 = vector.extract_strided_slice %0 {offsets = [0, 0], sizes = [16, 1], strides = [1, 1]} : vector<16x2xi32> to vector<16x1xi32>
    %5 = vector.extract_strided_slice %0 {offsets = [0, 1], sizes = [16, 1], strides = [1, 1]} : vector<16x2xi32> to vector<16x1xi32>
    %c64_i32_1 = arith.constant 64 : i32
    %6 = vector.broadcast %c64_i32_1 : i32 to vector<16x1xi32>
    %7 = arith.addi %5, %6 : vector<16x1xi32>
    %8 = vector.shape_cast %4 : vector<16x1xi32> to vector<16x1xi32>
    %9 = vector.broadcast %8 : vector<16x1xi32> to vector<16x128xi32>
    %10 = vector.shape_cast %7 : vector<16x1xi32> to vector<16x1xi32>
    %11 = vector.broadcast %10 : vector<16x1xi32> to vector<16x128xi32>
    %12 = arith.select %3, %9, %11 : vector<16x128xi1>, vector<16x128xi32>
    %13 = arith.cmpi eq, %1, %12 : vector<16x128xi32>
    %14 = arith.extui %13 : vector<16x128xi1> to vector<16x128xi32>
    %15 = arith.sitofp %14 : vector<16x128xi32> to vector<16x128xf32>
    %c0_2 = arith.constant 0 : index
    %c0_3 = arith.constant 0 : index
    %16 = vector.load %arg0[%c0_2, %c0_3] : memref<352x256xf32, #tpu.memory_space<vmem>>, vector<128x256xf32>
    %c192 = arith.constant 192 : index
    %c0_4 = arith.constant 0 : index
    %17 = vector.load %arg0[%c192, %c0_4] : memref<352x256xf32, #tpu.memory_space<vmem>>, vector<1x256xf32>
    %cst = arith.constant dense<0.000000e+00> : vector<16x256xf32>
    %18 = tpu.matmul %15, %16, %cst {dimension_numbers = #tpu.dot_dimension_numbers<[1], [0], [0], [1], [0, 0, 1, 1], [], []>} : vector<16x128xf32>, vector<128x256xf32>, vector<16x256xf32> -> vector<16x256xf32>
    %19 = vector.broadcast %17 : vector<1x256xf32> to vector<16x256xf32>
    %20 = arith.addf %18, %19 : vector<16x256xf32>
    %c0_5 = arith.constant 0 : index
    %c0_6 = arith.constant 0 : index
    %21 = vector.load %arg4[%c0_5, %c0_6] : memref<16x256xf32, #tpu.memory_space<vmem>>, vector<16x256xf32>
    tpu.vector_store %arg4[%c0_5, %c0_6], %20 {strides = array<i32>} : memref<16x256xf32, #tpu.memory_space<vmem>>, vector<16x256xf32>,
    %22 = vector.extract_strided_slice %0 {offsets = [0, 0], sizes = [16, 1], strides = [1, 1]} : vector<16x2xi32> to vector<16x1xi32>
    %c0_i32 = arith.constant 0 : i32
    %23 = vector.broadcast %c0_i32 : i32 to vector<16x1xi32>
    %24 = arith.cmpi ne, %22, %23 : vector<16x1xi32>
    %25 = arith.extui %24 : vector<16x1xi1> to vector<16x1xi32>
    %26 = arith.sitofp %25 : vector<16x1xi32> to vector<16x1xf32>
    %27 = vector.extract_strided_slice %0 {offsets = [0, 1], sizes = [16, 1], strides = [1, 1]} : vector<16x2xi32> to vector<16x1xi32>
    %c0_i32_7 = arith.constant 0 : i32
    %28 = vector.broadcast %c0_i32_7 : i32 to vector<16x1xi32>
    %29 = arith.cmpi ne, %27, %28 : vector<16x1xi32>
    %30 = arith.extui %29 : vector<16x1xi1> to vector<16x1xi32>
    %31 = arith.sitofp %30 : vector<16x1xi32> to vector<16x1xf32>
    %32 = tpu.iota {dimensions = array<i32: 1>} : vector<16x64xi32>
    %c32_i32 = arith.constant 32 : i32
    %33 = vector.broadcast %c32_i32 : i32 to vector<16x64xi32>
    %34 = arith.cmpi slt, %32, %33 : vector<16x64xi32>
    %35 = vector.shape_cast %26 : vector<16x1xf32> to vector<16x1xf32>
    %36 = vector.broadcast %35 : vector<16x1xf32> to vector<16x64xf32>
    %37 = vector.shape_cast %31 : vector<16x1xf32> to vector<16x1xf32>
    %38 = vector.broadcast %37 : vector<16x1xf32> to vector<16x64xf32>
    %39 = arith.select %34, %36, %38 : vector<16x64xi1>, vector<16x64xf32>
    %c0_8 = arith.constant 0 : index
    %c0_9 = arith.constant 0 : index
    %40 = vector.load %arg5[%c0_8, %c0_9] : memref<16x64xf32, #tpu.memory_space<vmem>>, vector<16x64xf32>
    tpu.vector_store %arg5[%c0_8, %c0_9], %39 {strides = array<i32>} : memref<16x64xf32, #tpu.memory_space<vmem>>, vector<16x64xf32>,
    %c128 = arith.constant 128 : index
    %c0_10 = arith.constant 0 : index
    %41 = vector.load %arg0[%c128, %c0_10] : memref<352x256xf32, #tpu.memory_space<vmem>>, vector<64x256xf32>
    %cst_11 = arith.constant 0.000000e+00 : f32
    %42 = vector.broadcast %cst_11 : f32 to vector<2x64xf32>
    %cst_12 = arith.constant 0.000000e+00 : f32
    %43 = vector.broadcast %cst_12 : f32 to vector<2x64xf32>
    %c0_13 = arith.constant 0 : index
    %c0_14 = arith.constant 0 : index
    %44 = vector.load %arg4[%c0_13, %c0_14] : memref<16x256xf32, #tpu.memory_space<vmem>>, vector<2x256xf32>
    %cst_15 = arith.constant dense<0.000000e+00> : vector<2x256xf32>
    %45 = tpu.matmul %42, %41, %cst_15 {dimension_numbers = #tpu.dot_dimension_numbers<[1], [0], [0], [1], [0, 0, 1, 1], [], []>} : vector<2x64xf32>, vector<64x256xf32>, vector<2x256xf32> -> vector<2x256xf32>
    %46 = arith.addf %44, %45 : vector<2x256xf32>
    %47 = arith.negf %46 : vector<2x256xf32>
    %48 = math.exp %47 : vector<2x256xf32>
    %cst_16 = arith.constant 1.000000e+00 : f32
    %49 = vector.broadcast %cst_16 : f32 to vector<2x256xf32>
    %50 = arith.addf %49, %48 : vector<2x256xf32>
    %51 = arith.divf %49, %50 : vector<2x256xf32>
    %52 = math.tanh %46 : vector<2x256xf32>
    %53 = vector.extract_strided_slice %51 {offsets = [0, 64], sizes = [2, 64], strides = [1, 1]} : vector<2x256xf32> to vector<2x64xf32>
    %54 = arith.mulf %53, %43 : vector<2x64xf32>
    %55 = vector.extract_strided_slice %51 {offsets = [0, 0], sizes = [2, 64], strides = [1, 1]} : vector<2x256xf32> to vector<2x64xf32>
    %56 = vector.extract_strided_slice %52 {offsets = [0, 128], sizes = [2, 64], strides = [1, 1]} : vector<2x256xf32> to vector<2x64xf32>
    %57 = arith.mulf %55, %56 : vector<2x64xf32>
    %58 = arith.addf %54, %57 : vector<2x64xf32>
    %59 = vector.extract_strided_slice %51 {offsets = [0, 192], sizes = [2, 64], strides = [1, 1]} : vector<2x256xf32> to vector<2x64xf32>
    %60 = math.tanh %58 : vector<2x64xf32>
    %61 = arith.mulf %59, %60 : vector<2x64xf32>
    %c0_17 = arith.constant 0 : index
    %c0_18 = arith.constant 0 : index
    %62 = vector.load %arg5[%c0_17, %c0_18] : memref<16x64xf32, #tpu.memory_space<vmem>>, vector<2x64xf32>
    %cst_19 = arith.constant 5.000000e-01 : f32
    %63 = vector.broadcast %cst_19 : f32 to vector<2x64xf32>
    %64 = arith.cmpf ogt, %62, %63 : vector<2x64xf32>
    %65 = arith.select %64, %61, %42 : vector<2x64xi1>, vector<2x64xf32>
    %cst_20 = arith.constant 5.000000e-01 : f32
    %66 = vector.broadcast %cst_20 : f32 to vector<2x64xf32>
    %67 = arith.cmpf ogt, %62, %66 : vector<2x64xf32>
    %68 = arith.select %67, %58, %43 : vector<2x64xi1>, vector<2x64xf32>
    %69 = arith.mulf %65, %62 : vector<2x64xf32>
    %70 = vector.extract_strided_slice %69 {offsets = [0, 0], sizes = [2, 32], strides = [1, 1]} : vector<2x64xf32> to vector<2x32xf32>
    %71 = vector.shape_cast %70 : vector<2x32xf32> to vector<2x1x32xf32>
    %c0_21 = arith.constant 0 : index
    %c0_22 = arith.constant 0 : index
    %c0_23 = arith.constant 0 : index
    %72 = vector.load %arg6[%c0_21, %c0_22, %c0_23] : memref<2x8x64xf32, #tpu.memory_space<vmem>>, vector<2x1x32xf32>
    tpu.vector_store %arg6[%c0_21, %c0_22, %c0_23], %71 {strides = array<i32>} : memref<2x8x64xf32, #tpu.memory_space<vmem>>, vector<2x1x32xf32>,
    %73 = vector.extract_strided_slice %69 {offsets = [0, 32], sizes = [2, 32], strides = [1, 1]} : vector<2x64xf32> to vector<2x32xf32>
    %74 = vector.shape_cast %73 : vector<2x32xf32> to vector<2x1x32xf32>
    %c0_24 = arith.constant 0 : index
    %c7 = arith.constant 7 : index
    %c32 = arith.constant 32 : index
    %75 = vector.load %arg6[%c0_24, %c7, %c32] : memref<2x8x64xf32, #tpu.memory_space<vmem>>, vector<2x1x32xf32>
    tpu.vector_store %arg6[%c0_24, %c7, %c32], %74 {strides = array<i32>} : memref<2x8x64xf32, #tpu.memory_space<vmem>>, vector<2x1x32xf32>,
    %c2 = arith.constant 2 : index
    %c0_25 = arith.constant 0 : index
    %76 = vector.load %arg4[%c2, %c0_25] : memref<16x256xf32, #tpu.memory_space<vmem>>, vector<2x256xf32>
    %cst_26 = arith.constant dense<0.000000e+00> : vector<2x256xf32>
    %77 = tpu.matmul %65, %41, %cst_26 {dimension_numbers = #tpu.dot_dimension_numbers<[1], [0], [0], [1], [0, 0, 1, 1], [], []>} : vector<2x64xf32>, vector<64x256xf32>, vector<2x256xf32> -> vector<2x256xf32>
    %78 = arith.addf %76, %77 : vector<2x256xf32>
    %79 = arith.negf %78 : vector<2x256xf32>
    %80 = math.exp %79 : vector<2x256xf32>
    %cst_27 = arith.constant 1.000000e+00 : f32
    %81 = vector.broadcast %cst_27 : f32 to vector<2x256xf32>
    %82 = arith.addf %81, %80 : vector<2x256xf32>
    %83 = arith.divf %81, %82 : vector<2x256xf32>
    %84 = math.tanh %78 : vector<2x256xf32>
    %85 = vector.extract_strided_slice %83 {offsets = [0, 64], sizes = [2, 64], strides = [1, 1]} : vector<2x256xf32> to vector<2x64xf32>
    %86 = arith.mulf %85, %68 : vector<2x64xf32>
    %87 = vector.extract_strided_slice %83 {offsets = [0, 0], sizes = [2, 64], strides = [1, 1]} : vector<2x256xf32> to vector<2x64xf32>
    %88 = vector.extract_strided_slice %84 {offsets = [0, 128], sizes = [2, 64], strides = [1, 1]} : vector<2x256xf32> to vector<2x64xf32>
    %89 = arith.mulf %87, %88 : vector<2x64xf32>
    %90 = arith.addf %86, %89 : vector<2x64xf32>
    %91 = vector.extract_strided_slice %83 {offsets = [0, 192], sizes = [2, 64], strides = [1, 1]} : vector<2x256xf32> to vector<2x64xf32>
    %92 = math.tanh %90 : vector<2x64xf32>
    %93 = arith.mulf %91, %92 : vector<2x64xf32>
    %c2_28 = arith.constant 2 : index
    %c0_29 = arith.constant 0 : index
    %94 = vector.load %arg5[%c2_28, %c0_29] : memref<16x64xf32, #tpu.memory_space<vmem>>, vector<2x64xf32>
    %cst_30 = arith.constant 5.000000e-01 : f32
    %95 = vector.broadcast %cst_30 : f32 to vector<2x64xf32>
    %96 = arith.cmpf ogt, %94, %95 : vector<2x64xf32>
    %97 = arith.select %96, %93, %65 : vector<2x64xi1>, vector<2x64xf32>
    %cst_31 = arith.constant 5.000000e-01 : f32
    %98 = vector.broadcast %cst_31 : f32 to vector<2x64xf32>
    %99 = arith.cmpf ogt, %94, %98 : vector<2x64xf32>
    %100 = arith.select %99, %90, %68 : vector<2x64xi1>, vector<2x64xf32>
    %101 = arith.mulf %97, %94 : vector<2x64xf32>
    %102 = vector.extract_strided_slice %101 {offsets = [0, 0], sizes = [2, 32], strides = [1, 1]} : vector<2x64xf32> to vector<2x32xf32>
    %103 = vector.shape_cast %102 : vector<2x32xf32> to vector<2x1x32xf32>
    %c0_32 = arith.constant 0 : index
    %c1 = arith.constant 1 : index
    %c0_33 = arith.constant 0 : index
    %104 = vector.load %arg6[%c0_32, %c1, %c0_33] : memref<2x8x64xf32, #tpu.memory_space<vmem>>, vector<2x1x32xf32>
    tpu.vector_store %arg6[%c0_32, %c1, %c0_33], %103 {strides = array<i32>} : memref<2x8x64xf32, #tpu.memory_space<vmem>>, vector<2x1x32xf32>,
    %105 = vector.extract_strided_slice %101 {offsets = [0, 32], sizes = [2, 32], strides = [1, 1]} : vector<2x64xf32> to vector<2x32xf32>
    %106 = vector.shape_cast %105 : vector<2x32xf32> to vector<2x1x32xf32>
    %c0_34 = arith.constant 0 : index
    %c6 = arith.constant 6 : index
    %c32_35 = arith.constant 32 : index
    %107 = vector.load %arg6[%c0_34, %c6, %c32_35] : memref<2x8x64xf32, #tpu.memory_space<vmem>>, vector<2x1x32xf32>
    tpu.vector_store %arg6[%c0_34, %c6, %c32_35], %106 {strides = array<i32>} : memref<2x8x64xf32, #tpu.memory_space<vmem>>, vector<2x1x32xf32>,
    %c4 = arith.constant 4 : index
    %c0_36 = arith.constant 0 : index
    %108 = vector.load %arg4[%c4, %c0_36] : memref<16x256xf32, #tpu.memory_space<vmem>>, vector<2x256xf32>
    %cst_37 = arith.constant dense<0.000000e+00> : vector<2x256xf32>
    %109 = tpu.matmul %97, %41, %cst_37 {dimension_numbers = #tpu.dot_dimension_numbers<[1], [0], [0], [1], [0, 0, 1, 1], [], []>} : vector<2x64xf32>, vector<64x256xf32>, vector<2x256xf32> -> vector<2x256xf32>
    %110 = arith.addf %108, %109 : vector<2x256xf32>
    %111 = arith.negf %110 : vector<2x256xf32>
    %112 = math.exp %111 : vector<2x256xf32>
    %cst_38 = arith.constant 1.000000e+00 : f32
    %113 = vector.broadcast %cst_38 : f32 to vector<2x256xf32>
    %114 = arith.addf %113, %112 : vector<2x256xf32>
    %115 = arith.divf %113, %114 : vector<2x256xf32>
    %116 = math.tanh %110 : vector<2x256xf32>
    %117 = vector.extract_strided_slice %115 {offsets = [0, 64], sizes = [2, 64], strides = [1, 1]} : vector<2x256xf32> to vector<2x64xf32>
    %118 = arith.mulf %117, %100 : vector<2x64xf32>
    %119 = vector.extract_strided_slice %115 {offsets = [0, 0], sizes = [2, 64], strides = [1, 1]} : vector<2x256xf32> to vector<2x64xf32>
    %120 = vector.extract_strided_slice %116 {offsets = [0, 128], sizes = [2, 64], strides = [1, 1]} : vector<2x256xf32> to vector<2x64xf32>
    %121 = arith.mulf %119, %120 : vector<2x64xf32>
    %122 = arith.addf %118, %121 : vector<2x64xf32>
    %123 = vector.extract_strided_slice %115 {offsets = [0, 192], sizes = [2, 64], strides = [1, 1]} : vector<2x256xf32> to vector<2x64xf32>
    %124 = math.tanh %122 : vector<2x64xf32>
    %125 = arith.mulf %123, %124 : vector<2x64xf32>
    %c4_39 = arith.constant 4 : index
    %c0_40 = arith.constant 0 : index
    %126 = vector.load %arg5[%c4_39, %c0_40] : memref<16x64xf32, #tpu.memory_space<vmem>>, vector<2x64xf32>
    %cst_41 = arith.constant 5.000000e-01 : f32
    %127 = vector.broadcast %cst_41 : f32 to vector<2x64xf32>
    %128 = arith.cmpf ogt, %126, %127 : vector<2x64xf32>
    %129 = arith.select %128, %125, %97 : vector<2x64xi1>, vector<2x64xf32>
    %cst_42 = arith.constant 5.000000e-01 : f32
    %130 = vector.broadcast %cst_42 : f32 to vector<2x64xf32>
    %131 = arith.cmpf ogt, %126, %130 : vector<2x64xf32>
    %132 = arith.select %131, %122, %100 : vector<2x64xi1>, vector<2x64xf32>
    %133 = arith.mulf %129, %126 : vector<2x64xf32>
    %134 = vector.extract_strided_slice %133 {offsets = [0, 0], sizes = [2, 32], strides = [1, 1]} : vector<2x64xf32> to vector<2x32xf32>
    %135 = vector.shape_cast %134 : vector<2x32xf32> to vector<2x1x32xf32>
    %c0_43 = arith.constant 0 : index
    %c2_44 = arith.constant 2 : index
    %c0_45 = arith.constant 0 : index
    %136 = vector.load %arg6[%c0_43, %c2_44, %c0_45] : memref<2x8x64xf32, #tpu.memory_space<vmem>>, vector<2x1x32xf32>
    tpu.vector_store %arg6[%c0_43, %c2_44, %c0_45], %135 {strides = array<i32>} : memref<2x8x64xf32, #tpu.memory_space<vmem>>, vector<2x1x32xf32>,
    %137 = vector.extract_strided_slice %133 {offsets = [0, 32], sizes = [2, 32], strides = [1, 1]} : vector<2x64xf32> to vector<2x32xf32>
    %138 = vector.shape_cast %137 : vector<2x32xf32> to vector<2x1x32xf32>
    %c0_46 = arith.constant 0 : index
    %c5 = arith.constant 5 : index
    %c32_47 = arith.constant 32 : index
    %139 = vector.load %arg6[%c0_46, %c5, %c32_47] : memref<2x8x64xf32, #tpu.memory_space<vmem>>, vector<2x1x32xf32>
    tpu.vector_store %arg6[%c0_46, %c5, %c32_47], %138 {strides = array<i32>} : memref<2x8x64xf32, #tpu.memory_space<vmem>>, vector<2x1x32xf32>,
    %c6_48 = arith.constant 6 : index
    %c0_49 = arith.constant 0 : index
    %140 = vector.load %arg4[%c6_48, %c0_49] : memref<16x256xf32, #tpu.memory_space<vmem>>, vector<2x256xf32>
    %cst_50 = arith.constant dense<0.000000e+00> : vector<2x256xf32>
    %141 = tpu.matmul %129, %41, %cst_50 {dimension_numbers = #tpu.dot_dimension_numbers<[1], [0], [0], [1], [0, 0, 1, 1], [], []>} : vector<2x64xf32>, vector<64x256xf32>, vector<2x256xf32> -> vector<2x256xf32>
    %142 = arith.addf %140, %141 : vector<2x256xf32>
    %143 = arith.negf %142 : vector<2x256xf32>
    %144 = math.exp %143 : vector<2x256xf32>
    %cst_51 = arith.constant 1.000000e+00 : f32
    %145 = vector.broadcast %cst_51 : f32 to vector<2x256xf32>
    %146 = arith.addf %145, %144 : vector<2x256xf32>
    %147 = arith.divf %145, %146 : vector<2x256xf32>
    %148 = math.tanh %142 : vector<2x256xf32>
    %149 = vector.extract_strided_slice %147 {offsets = [0, 64], sizes = [2, 64], strides = [1, 1]} : vector<2x256xf32> to vector<2x64xf32>
    %150 = arith.mulf %149, %132 : vector<2x64xf32>
    %151 = vector.extract_strided_slice %147 {offsets = [0, 0], sizes = [2, 64], strides = [1, 1]} : vector<2x256xf32> to vector<2x64xf32>
    %152 = vector.extract_strided_slice %148 {offsets = [0, 128], sizes = [2, 64], strides = [1, 1]} : vector<2x256xf32> to vector<2x64xf32>
    %153 = arith.mulf %151, %152 : vector<2x64xf32>
    %154 = arith.addf %150, %153 : vector<2x64xf32>
    %155 = vector.extract_strided_slice %147 {offsets = [0, 192], sizes = [2, 64], strides = [1, 1]} : vector<2x256xf32> to vector<2x64xf32>
    %156 = math.tanh %154 : vector<2x64xf32>
    %157 = arith.mulf %155, %156 : vector<2x64xf32>
    %c6_52 = arith.constant 6 : index
    %c0_53 = arith.constant 0 : index
    %158 = vector.load %arg5[%c6_52, %c0_53] : memref<16x64xf32, #tpu.memory_space<vmem>>, vector<2x64xf32>
    %cst_54 = arith.constant 5.000000e-01 : f32
    %159 = vector.broadcast %cst_54 : f32 to vector<2x64xf32>
    %160 = arith.cmpf ogt, %158, %159 : vector<2x64xf32>
    %161 = arith.select %160, %157, %129 : vector<2x64xi1>, vector<2x64xf32>
    %cst_55 = arith.constant 5.000000e-01 : f32
    %162 = vector.broadcast %cst_55 : f32 to vector<2x64xf32>
    %163 = arith.cmpf ogt, %158, %162 : vector<2x64xf32>
    %164 = arith.select %163, %154, %132 : vector<2x64xi1>, vector<2x64xf32>
    %165 = arith.mulf %161, %158 : vector<2x64xf32>
    %166 = vector.extract_strided_slice %165 {offsets = [0, 0], sizes = [2, 32], strides = [1, 1]} : vector<2x64xf32> to vector<2x32xf32>
    %167 = vector.shape_cast %166 : vector<2x32xf32> to vector<2x1x32xf32>
    %c0_56 = arith.constant 0 : index
    %c3 = arith.constant 3 : index
    %c0_57 = arith.constant 0 : index
    %168 = vector.load %arg6[%c0_56, %c3, %c0_57] : memref<2x8x64xf32, #tpu.memory_space<vmem>>, vector<2x1x32xf32>
    tpu.vector_store %arg6[%c0_56, %c3, %c0_57], %167 {strides = array<i32>} : memref<2x8x64xf32, #tpu.memory_space<vmem>>, vector<2x1x32xf32>,
    %169 = vector.extract_strided_slice %165 {offsets = [0, 32], sizes = [2, 32], strides = [1, 1]} : vector<2x64xf32> to vector<2x32xf32>
    %170 = vector.shape_cast %169 : vector<2x32xf32> to vector<2x1x32xf32>
    %c0_58 = arith.constant 0 : index
    %c4_59 = arith.constant 4 : index
    %c32_60 = arith.constant 32 : index
    %171 = vector.load %arg6[%c0_58, %c4_59, %c32_60] : memref<2x8x64xf32, #tpu.memory_space<vmem>>, vector<2x1x32xf32>
    tpu.vector_store %arg6[%c0_58, %c4_59, %c32_60], %170 {strides = array<i32>} : memref<2x8x64xf32, #tpu.memory_space<vmem>>, vector<2x1x32xf32>,
    %c8 = arith.constant 8 : index
    %c0_61 = arith.constant 0 : index
    %172 = vector.load %arg4[%c8, %c0_61] : memref<16x256xf32, #tpu.memory_space<vmem>>, vector<2x256xf32>
    %cst_62 = arith.constant dense<0.000000e+00> : vector<2x256xf32>
    %173 = tpu.matmul %161, %41, %cst_62 {dimension_numbers = #tpu.dot_dimension_numbers<[1], [0], [0], [1], [0, 0, 1, 1], [], []>} : vector<2x64xf32>, vector<64x256xf32>, vector<2x256xf32> -> vector<2x256xf32>
    %174 = arith.addf %172, %173 : vector<2x256xf32>
    %175 = arith.negf %174 : vector<2x256xf32>
    %176 = math.exp %175 : vector<2x256xf32>
    %cst_63 = arith.constant 1.000000e+00 : f32
    %177 = vector.broadcast %cst_63 : f32 to vector<2x256xf32>
    %178 = arith.addf %177, %176 : vector<2x256xf32>
    %179 = arith.divf %177, %178 : vector<2x256xf32>
    %180 = math.tanh %174 : vector<2x256xf32>
    %181 = vector.extract_strided_slice %179 {offsets = [0, 64], sizes = [2, 64], strides = [1, 1]} : vector<2x256xf32> to vector<2x64xf32>
    %182 = arith.mulf %181, %164 : vector<2x64xf32>
    %183 = vector.extract_strided_slice %179 {offsets = [0, 0], sizes = [2, 64], strides = [1, 1]} : vector<2x256xf32> to vector<2x64xf32>
    %184 = vector.extract_strided_slice %180 {offsets = [0, 128], sizes = [2, 64], strides = [1, 1]} : vector<2x256xf32> to vector<2x64xf32>
    %185 = arith.mulf %183, %184 : vector<2x64xf32>
    %186 = arith.addf %182, %185 : vector<2x64xf32>
    %187 = vector.extract_strided_slice %179 {offsets = [0, 192], sizes = [2, 64], strides = [1, 1]} : vector<2x256xf32> to vector<2x64xf32>
    %188 = math.tanh %186 : vector<2x64xf32>
    %189 = arith.mulf %187, %188 : vector<2x64xf32>
    %c8_64 = arith.constant 8 : index
    %c0_65 = arith.constant 0 : index
    %190 = vector.load %arg5[%c8_64, %c0_65] : memref<16x64xf32, #tpu.memory_space<vmem>>, vector<2x64xf32>
    %cst_66 = arith.constant 5.000000e-01 : f32
    %191 = vector.broadcast %cst_66 : f32 to vector<2x64xf32>
    %192 = arith.cmpf ogt, %190, %191 : vector<2x64xf32>
    %193 = arith.select %192, %189, %161 : vector<2x64xi1>, vector<2x64xf32>
    %cst_67 = arith.constant 5.000000e-01 : f32
    %194 = vector.broadcast %cst_67 : f32 to vector<2x64xf32>
    %195 = arith.cmpf ogt, %190, %194 : vector<2x64xf32>
    %196 = arith.select %195, %186, %164 : vector<2x64xi1>, vector<2x64xf32>
    %197 = arith.mulf %193, %190 : vector<2x64xf32>
    %198 = vector.extract_strided_slice %197 {offsets = [0, 0], sizes = [2, 32], strides = [1, 1]} : vector<2x64xf32> to vector<2x32xf32>
    %199 = vector.shape_cast %198 : vector<2x32xf32> to vector<2x1x32xf32>
    %c0_68 = arith.constant 0 : index
    %c4_69 = arith.constant 4 : index
    %c0_70 = arith.constant 0 : index
    %200 = vector.load %arg6[%c0_68, %c4_69, %c0_70] : memref<2x8x64xf32, #tpu.memory_space<vmem>>, vector<2x1x32xf32>
    tpu.vector_store %arg6[%c0_68, %c4_69, %c0_70], %199 {strides = array<i32>} : memref<2x8x64xf32, #tpu.memory_space<vmem>>, vector<2x1x32xf32>,
    %201 = vector.extract_strided_slice %197 {offsets = [0, 32], sizes = [2, 32], strides = [1, 1]} : vector<2x64xf32> to vector<2x32xf32>
    %202 = vector.shape_cast %201 : vector<2x32xf32> to vector<2x1x32xf32>
    %c0_71 = arith.constant 0 : index
    %c3_72 = arith.constant 3 : index
    %c32_73 = arith.constant 32 : index
    %203 = vector.load %arg6[%c0_71, %c3_72, %c32_73] : memref<2x8x64xf32, #tpu.memory_space<vmem>>, vector<2x1x32xf32>
    tpu.vector_store %arg6[%c0_71, %c3_72, %c32_73], %202 {strides = array<i32>} : memref<2x8x64xf32, #tpu.memory_space<vmem>>, vector<2x1x32xf32>,
    %c10 = arith.constant 10 : index
    %c0_74 = arith.constant 0 : index
    %204 = vector.load %arg4[%c10, %c0_74] : memref<16x256xf32, #tpu.memory_space<vmem>>, vector<2x256xf32>
    %cst_75 = arith.constant dense<0.000000e+00> : vector<2x256xf32>
    %205 = tpu.matmul %193, %41, %cst_75 {dimension_numbers = #tpu.dot_dimension_numbers<[1], [0], [0], [1], [0, 0, 1, 1], [], []>} : vector<2x64xf32>, vector<64x256xf32>, vector<2x256xf32> -> vector<2x256xf32>
    %206 = arith.addf %204, %205 : vector<2x256xf32>
    %207 = arith.negf %206 : vector<2x256xf32>
    %208 = math.exp %207 : vector<2x256xf32>
    %cst_76 = arith.constant 1.000000e+00 : f32
    %209 = vector.broadcast %cst_76 : f32 to vector<2x256xf32>
    %210 = arith.addf %209, %208 : vector<2x256xf32>
    %211 = arith.divf %209, %210 : vector<2x256xf32>
    %212 = math.tanh %206 : vector<2x256xf32>
    %213 = vector.extract_strided_slice %211 {offsets = [0, 64], sizes = [2, 64], strides = [1, 1]} : vector<2x256xf32> to vector<2x64xf32>
    %214 = arith.mulf %213, %196 : vector<2x64xf32>
    %215 = vector.extract_strided_slice %211 {offsets = [0, 0], sizes = [2, 64], strides = [1, 1]} : vector<2x256xf32> to vector<2x64xf32>
    %216 = vector.extract_strided_slice %212 {offsets = [0, 128], sizes = [2, 64], strides = [1, 1]} : vector<2x256xf32> to vector<2x64xf32>
    %217 = arith.mulf %215, %216 : vector<2x64xf32>
    %218 = arith.addf %214, %217 : vector<2x64xf32>
    %219 = vector.extract_strided_slice %211 {offsets = [0, 192], sizes = [2, 64], strides = [1, 1]} : vector<2x256xf32> to vector<2x64xf32>
    %220 = math.tanh %218 : vector<2x64xf32>
    %221 = arith.mulf %219, %220 : vector<2x64xf32>
    %c10_77 = arith.constant 10 : index
    %c0_78 = arith.constant 0 : index
    %222 = vector.load %arg5[%c10_77, %c0_78] : memref<16x64xf32, #tpu.memory_space<vmem>>, vector<2x64xf32>
    %cst_79 = arith.constant 5.000000e-01 : f32
    %223 = vector.broadcast %cst_79 : f32 to vector<2x64xf32>
    %224 = arith.cmpf ogt, %222, %223 : vector<2x64xf32>
    %225 = arith.select %224, %221, %193 : vector<2x64xi1>, vector<2x64xf32>
    %cst_80 = arith.constant 5.000000e-01 : f32
    %226 = vector.broadcast %cst_80 : f32 to vector<2x64xf32>
    %227 = arith.cmpf ogt, %222, %226 : vector<2x64xf32>
    %228 = arith.select %227, %218, %196 : vector<2x64xi1>, vector<2x64xf32>
    %229 = arith.mulf %225, %222 : vector<2x64xf32>
    %230 = vector.extract_strided_slice %229 {offsets = [0, 0], sizes = [2, 32], strides = [1, 1]} : vector<2x64xf32> to vector<2x32xf32>
    %231 = vector.shape_cast %230 : vector<2x32xf32> to vector<2x1x32xf32>
    %c0_81 = arith.constant 0 : index
    %c5_82 = arith.constant 5 : index
    %c0_83 = arith.constant 0 : index
    %232 = vector.load %arg6[%c0_81, %c5_82, %c0_83] : memref<2x8x64xf32, #tpu.memory_space<vmem>>, vector<2x1x32xf32>
    tpu.vector_store %arg6[%c0_81, %c5_82, %c0_83], %231 {strides = array<i32>} : memref<2x8x64xf32, #tpu.memory_space<vmem>>, vector<2x1x32xf32>,
    %233 = vector.extract_strided_slice %229 {offsets = [0, 32], sizes = [2, 32], strides = [1, 1]} : vector<2x64xf32> to vector<2x32xf32>
    %234 = vector.shape_cast %233 : vector<2x32xf32> to vector<2x1x32xf32>
    %c0_84 = arith.constant 0 : index
    %c2_85 = arith.constant 2 : index
    %c32_86 = arith.constant 32 : index
    %235 = vector.load %arg6[%c0_84, %c2_85, %c32_86] : memref<2x8x64xf32, #tpu.memory_space<vmem>>, vector<2x1x32xf32>
    tpu.vector_store %arg6[%c0_84, %c2_85, %c32_86], %234 {strides = array<i32>} : memref<2x8x64xf32, #tpu.memory_space<vmem>>, vector<2x1x32xf32>,
    %c12 = arith.constant 12 : index
    %c0_87 = arith.constant 0 : index
    %236 = vector.load %arg4[%c12, %c0_87] : memref<16x256xf32, #tpu.memory_space<vmem>>, vector<2x256xf32>
    %cst_88 = arith.constant dense<0.000000e+00> : vector<2x256xf32>
    %237 = tpu.matmul %225, %41, %cst_88 {dimension_numbers = #tpu.dot_dimension_numbers<[1], [0], [0], [1], [0, 0, 1, 1], [], []>} : vector<2x64xf32>, vector<64x256xf32>, vector<2x256xf32> -> vector<2x256xf32>
    %238 = arith.addf %236, %237 : vector<2x256xf32>
    %239 = arith.negf %238 : vector<2x256xf32>
    %240 = math.exp %239 : vector<2x256xf32>
    %cst_89 = arith.constant 1.000000e+00 : f32
    %241 = vector.broadcast %cst_89 : f32 to vector<2x256xf32>
    %242 = arith.addf %241, %240 : vector<2x256xf32>
    %243 = arith.divf %241, %242 : vector<2x256xf32>
    %244 = math.tanh %238 : vector<2x256xf32>
    %245 = vector.extract_strided_slice %243 {offsets = [0, 64], sizes = [2, 64], strides = [1, 1]} : vector<2x256xf32> to vector<2x64xf32>
    %246 = arith.mulf %245, %228 : vector<2x64xf32>
    %247 = vector.extract_strided_slice %243 {offsets = [0, 0], sizes = [2, 64], strides = [1, 1]} : vector<2x256xf32> to vector<2x64xf32>
    %248 = vector.extract_strided_slice %244 {offsets = [0, 128], sizes = [2, 64], strides = [1, 1]} : vector<2x256xf32> to vector<2x64xf32>
    %249 = arith.mulf %247, %248 : vector<2x64xf32>
    %250 = arith.addf %246, %249 : vector<2x64xf32>
    %251 = vector.extract_strided_slice %243 {offsets = [0, 192], sizes = [2, 64], strides = [1, 1]} : vector<2x256xf32> to vector<2x64xf32>
    %252 = math.tanh %250 : vector<2x64xf32>
    %253 = arith.mulf %251, %252 : vector<2x64xf32>
    %c12_90 = arith.constant 12 : index
    %c0_91 = arith.constant 0 : index
    %254 = vector.load %arg5[%c12_90, %c0_91] : memref<16x64xf32, #tpu.memory_space<vmem>>, vector<2x64xf32>
    %cst_92 = arith.constant 5.000000e-01 : f32
    %255 = vector.broadcast %cst_92 : f32 to vector<2x64xf32>
    %256 = arith.cmpf ogt, %254, %255 : vector<2x64xf32>
    %257 = arith.select %256, %253, %225 : vector<2x64xi1>, vector<2x64xf32>
    %cst_93 = arith.constant 5.000000e-01 : f32
    %258 = vector.broadcast %cst_93 : f32 to vector<2x64xf32>
    %259 = arith.cmpf ogt, %254, %258 : vector<2x64xf32>
    %260 = arith.select %259, %250, %228 : vector<2x64xi1>, vector<2x64xf32>
    %261 = arith.mulf %257, %254 : vector<2x64xf32>
    %262 = vector.extract_strided_slice %261 {offsets = [0, 0], sizes = [2, 32], strides = [1, 1]} : vector<2x64xf32> to vector<2x32xf32>
    %263 = vector.shape_cast %262 : vector<2x32xf32> to vector<2x1x32xf32>
    %c0_94 = arith.constant 0 : index
    %c6_95 = arith.constant 6 : index
    %c0_96 = arith.constant 0 : index
    %264 = vector.load %arg6[%c0_94, %c6_95, %c0_96] : memref<2x8x64xf32, #tpu.memory_space<vmem>>, vector<2x1x32xf32>
    tpu.vector_store %arg6[%c0_94, %c6_95, %c0_96], %263 {strides = array<i32>} : memref<2x8x64xf32, #tpu.memory_space<vmem>>, vector<2x1x32xf32>,
    %265 = vector.extract_strided_slice %261 {offsets = [0, 32], sizes = [2, 32], strides = [1, 1]} : vector<2x64xf32> to vector<2x32xf32>
    %266 = vector.shape_cast %265 : vector<2x32xf32> to vector<2x1x32xf32>
    %c0_97 = arith.constant 0 : index
    %c1_98 = arith.constant 1 : index
    %c32_99 = arith.constant 32 : index
    %267 = vector.load %arg6[%c0_97, %c1_98, %c32_99] : memref<2x8x64xf32, #tpu.memory_space<vmem>>, vector<2x1x32xf32>
    tpu.vector_store %arg6[%c0_97, %c1_98, %c32_99], %266 {strides = array<i32>} : memref<2x8x64xf32, #tpu.memory_space<vmem>>, vector<2x1x32xf32>,
    %c14 = arith.constant 14 : index
    %c0_100 = arith.constant 0 : index
    %268 = vector.load %arg4[%c14, %c0_100] : memref<16x256xf32, #tpu.memory_space<vmem>>, vector<2x256xf32>
    %cst_101 = arith.constant dense<0.000000e+00> : vector<2x256xf32>
    %269 = tpu.matmul %257, %41, %cst_101 {dimension_numbers = #tpu.dot_dimension_numbers<[1], [0], [0], [1], [0, 0, 1, 1], [], []>} : vector<2x64xf32>, vector<64x256xf32>, vector<2x256xf32> -> vector<2x256xf32>
    %270 = arith.addf %268, %269 : vector<2x256xf32>
    %271 = arith.negf %270 : vector<2x256xf32>
    %272 = math.exp %271 : vector<2x256xf32>
    %cst_102 = arith.constant 1.000000e+00 : f32
    %273 = vector.broadcast %cst_102 : f32 to vector<2x256xf32>
    %274 = arith.addf %273, %272 : vector<2x256xf32>
    %275 = arith.divf %273, %274 : vector<2x256xf32>
    %276 = math.tanh %270 : vector<2x256xf32>
    %277 = vector.extract_strided_slice %275 {offsets = [0, 64], sizes = [2, 64], strides = [1, 1]} : vector<2x256xf32> to vector<2x64xf32>
    %278 = arith.mulf %277, %260 : vector<2x64xf32>
    %279 = vector.extract_strided_slice %275 {offsets = [0, 0], sizes = [2, 64], strides = [1, 1]} : vector<2x256xf32> to vector<2x64xf32>
    %280 = vector.extract_strided_slice %276 {offsets = [0, 128], sizes = [2, 64], strides = [1, 1]} : vector<2x256xf32> to vector<2x64xf32>
    %281 = arith.mulf %279, %280 : vector<2x64xf32>
    %282 = arith.addf %278, %281 : vector<2x64xf32>
    %283 = vector.extract_strided_slice %275 {offsets = [0, 192], sizes = [2, 64], strides = [1, 1]} : vector<2x256xf32> to vector<2x64xf32>
    %284 = math.tanh %282 : vector<2x64xf32>
    %285 = arith.mulf %283, %284 : vector<2x64xf32>
    %c14_103 = arith.constant 14 : index
    %c0_104 = arith.constant 0 : index
    %286 = vector.load %arg5[%c14_103, %c0_104] : memref<16x64xf32, #tpu.memory_space<vmem>>, vector<2x64xf32>
    %cst_105 = arith.constant 5.000000e-01 : f32
    %287 = vector.broadcast %cst_105 : f32 to vector<2x64xf32>
    %288 = arith.cmpf ogt, %286, %287 : vector<2x64xf32>
    %289 = arith.select %288, %285, %257 : vector<2x64xi1>, vector<2x64xf32>
    %290 = arith.mulf %289, %286 : vector<2x64xf32>
    %291 = vector.extract_strided_slice %290 {offsets = [0, 0], sizes = [2, 32], strides = [1, 1]} : vector<2x64xf32> to vector<2x32xf32>
    %292 = vector.shape_cast %291 : vector<2x32xf32> to vector<2x1x32xf32>
    %c0_106 = arith.constant 0 : index
    %c7_107 = arith.constant 7 : index
    %c0_108 = arith.constant 0 : index
    %293 = vector.load %arg6[%c0_106, %c7_107, %c0_108] : memref<2x8x64xf32, #tpu.memory_space<vmem>>, vector<2x1x32xf32>
    tpu.vector_store %arg6[%c0_106, %c7_107, %c0_108], %292 {strides = array<i32>} : memref<2x8x64xf32, #tpu.memory_space<vmem>>, vector<2x1x32xf32>,
    %294 = vector.extract_strided_slice %290 {offsets = [0, 32], sizes = [2, 32], strides = [1, 1]} : vector<2x64xf32> to vector<2x32xf32>
    %295 = vector.shape_cast %294 : vector<2x32xf32> to vector<2x1x32xf32>
    %c0_109 = arith.constant 0 : index
    %c0_110 = arith.constant 0 : index
    %c32_111 = arith.constant 32 : index
    %296 = vector.load %arg6[%c0_109, %c0_110, %c32_111] : memref<2x8x64xf32, #tpu.memory_space<vmem>>, vector<2x1x32xf32>
    tpu.vector_store %arg6[%c0_109, %c0_110, %c32_111], %295 {strides = array<i32>} : memref<2x8x64xf32, #tpu.memory_space<vmem>>, vector<2x1x32xf32>,
    %c0_112 = arith.constant 0 : index
    %c0_113 = arith.constant 0 : index
    %c0_114 = arith.constant 0 : index
    %297 = vector.load %arg6[%c0_112, %c0_113, %c0_114] : memref<2x8x64xf32, #tpu.memory_space<vmem>>, vector<2x8x64xf32>
    %298 = vector.shape_cast %297 : vector<2x8x64xf32> to vector<16x64xf32>
    %c200 = arith.constant 200 : index
    %c0_115 = arith.constant 0 : index
    %299 = vector.load %arg0[%c200, %c0_115] : memref<352x256xf32, #tpu.memory_space<vmem>>, vector<64x16xf32>
    %cst_116 = arith.constant dense<0.000000e+00> : vector<16x16xf32>
    %300 = tpu.matmul %298, %299, %cst_116 {dimension_numbers = #tpu.dot_dimension_numbers<[1], [0], [0], [1], [0, 0, 1, 1], [], []>} : vector<16x64xf32>, vector<64x16xf32>, vector<16x16xf32> -> vector<16x16xf32>
    %301 = vector.shape_cast %300 : vector<16x16xf32> to vector<2x8x16xf32>
    %302 = tpu.transpose %301, [0, 2, 1] : vector<2x8x16xf32> -> vector<2x16x8xf32>
    %c0_117 = arith.constant 0 : index
    %c0_118 = arith.constant 0 : index
    %c0_119 = arith.constant 0 : index
    %303 = vector.load %arg2[%c0_117, %c0_118, %c0_119] : memref<2x1x8xf32, #tpu.memory_space<vmem>>, vector<2x1x8xf32>
    %304 = vector.broadcast %303 : vector<2x1x8xf32> to vector<2x16x8xf32>
    %305 = arith.addf %302, %304 : vector<2x16x8xf32>
    %cst_120 = arith.constant dense<0xFF800000> : vector<2x16xf32>
    %306 = vector.multi_reduction <maximumf>, %305, %cst_120 [2] : vector<2x16x8xf32> to vector<2x16xf32>
    %307 = vector.shape_cast %306 : vector<2x16xf32> to vector<2x16x1xf32>
    %308 = vector.broadcast %307 : vector<2x16x1xf32> to vector<2x16x8xf32>
    %309 = arith.subf %305, %308 : vector<2x16x8xf32>
    %310 = math.exp %309 : vector<2x16x8xf32>
    %cst_121 = arith.constant dense<0.000000e+00> : vector<2x16xf32>
    %311 = vector.multi_reduction <add>, %310, %cst_121 [2] : vector<2x16x8xf32> to vector<2x16xf32>
    %312 = vector.shape_cast %311 : vector<2x16xf32> to vector<2x16x1xf32>
    %313 = tpu.reciprocal %312 {approx = true} : vector<2x16x1xf32> -> vector<2x16x1xf32>
    %314 = vector.broadcast %313 : vector<2x16x1xf32> to vector<2x16x8xf32>
    %315 = arith.mulf %310, %314 : vector<2x16x8xf32>
    "tpu.trace_start"() <{level = 10 : i32, message = "blt,btd->bld"}> : () -> ()
    %cst_122 = arith.constant dense<0.000000e+00> : vector<2x16x64xf32>
    %316 = tpu.matmul %315, %297, %cst_122 {dimension_numbers = #tpu.dot_dimension_numbers<[2], [1], [1], [2], [0, 0, 0, 1, 1, 2], [0], [0]>} : vector<2x16x8xf32>, vector<2x8x64xf32>, vector<2x16x64xf32> -> vector<2x16x64xf32>
    "tpu.trace_stop"() : () -> ()
    %c264 = arith.constant 264 : index
    %c0_123 = arith.constant 0 : index
    %317 = vector.load %arg0[%c264, %c0_123] : memref<352x256xf32, #tpu.memory_space<vmem>>, vector<64x32xf32>
    %c328 = arith.constant 328 : index
    %c0_124 = arith.constant 0 : index
    %318 = vector.load %arg0[%c328, %c0_124] : memref<352x256xf32, #tpu.memory_space<vmem>>, vector<1x32xf32>
    %c336 = arith.constant 336 : index
    %c0_125 = arith.constant 0 : index
    %319 = vector.load %arg0[%c336, %c0_125] : memref<352x256xf32, #tpu.memory_space<vmem>>, vector<1x32xf32>
    %c344 = arith.constant 344 : index
    %c0_126 = arith.constant 0 : index
    %320 = vector.load %arg0[%c344, %c0_126] : memref<352x256xf32, #tpu.memory_space<vmem>>, vector<1x1xf32>
    %321 = vector.shape_cast %316 : vector<2x16x64xf32> to vector<32x64xf32>
    %cst_127 = arith.constant dense<0.000000e+00> : vector<32x32xf32>
    %322 = tpu.matmul %321, %317, %cst_127 {dimension_numbers = #tpu.dot_dimension_numbers<[1], [0], [0], [1], [0, 0, 1, 1], [], []>} : vector<32x64xf32>, vector<64x32xf32>, vector<32x32xf32> -> vector<32x32xf32>
    %323 = vector.broadcast %318 : vector<1x32xf32> to vector<32x32xf32>
    %324 = arith.addf %322, %323 : vector<32x32xf32>
    %cst_128 = arith.constant 0.000000e+00 : f32
    %325 = vector.broadcast %cst_128 : f32 to vector<32x32xf32>
    %326 = arith.maximumf %324, %325 : vector<32x32xf32>
    %327 = vector.broadcast %319 : vector<1x32xf32> to vector<32x32xf32>
    %328 = arith.mulf %326, %327 : vector<32x32xf32>
    %cst_129 = arith.constant dense<0.000000e+00> : vector<32xf32>
    %329 = vector.multi_reduction <add>, %328, %cst_129 [1] : vector<32x32xf32> to vector<32xf32>
    %330 = vector.shape_cast %329 : vector<32xf32> to vector<32x1xf32>
    %331 = vector.shape_cast %330 : vector<32x1xf32> to vector<2x16xf32>
    %332 = vector.broadcast %320 : vector<1x1xf32> to vector<2x16xf32>
    %333 = arith.addf %331, %332 : vector<2x16xf32>
    %c0_130 = arith.constant 0 : index
    %c0_131 = arith.constant 0 : index
    %334 = vector.load %arg3[%c0_130, %c0_131] : memref<2x16xf32, #tpu.memory_space<vmem>>, vector<2x16xf32>
    tpu.vector_store %arg3[%c0_130, %c0_131], %333 {strides = array<i32>} : memref<2x16xf32, #tpu.memory_space<vmem>>, vector<2x16xf32>,
    return
  }
}

</mosaic_0001>

<llo_original>
// kernel: attention_xml_forward.1
$region0: #{attention_xml_forward.1}
  #allocation0 [shape = 'u32[]', space=smem, size = 0x4, offset = 0x4, fixed_abs, tag = 'smem constant byte address 0x4 - core index']
  #allocation1 [shape = 'u32[144,128]{1,0:T(1,128)}', space=vmem, size = 0x12000, scoped, tag = 'internal scratch']
  #allocation2 [shape = 'f32[16,256]{1,0:T(8,128)}', space=vmem, size = 0x4000, scoped, tag = 'scratch operand']
  #allocation3 [shape = 'f32[16,64]{1,0:T(8,128)}', space=vmem, size = 0x2000, scoped, tag = 'scratch operand']
  #allocation4 [shape = 'f32[2,8,64]{2,1,0:T(8,128)}', space=vmem, size = 0x2000, scoped, tag = 'scratch operand']
  %s0 = inlined_call_operand.hbm [shape: f32[352,256], index: 0, kind: input, shape index: {}]
  %s1 = inlined_call_operand.vmem [shape: s32[16,2], index: 1, kind: input, shape index: {}]
  %s2 = inlined_call_operand.vmem [shape: f32[2,1,8], index: 2, kind: input, shape index: {}]
  %s3 = inlined_call_operand.hbm [shape: f32[2,16], index: 3, kind: output, shape index: {}]
  %s4 = sld [smem:[#allocation0]]
  $region26: #{attention_xml_forward.1} parent=0
    _
  %s6 = ssub.s32 1, %s4
  %s7 = scalar_select 0, %s6, %s4
  $region1: #{attention_xml_forward.1} parent=0
    #allocation5 [shape = 'u8[360448]{0}', space=vmem, size = 0x58000, scoped, tag = 'input window, operand 0, single buffered']
    #allocation6 [shape = 's32[1]{0}', space=sflag, size = 0x4, scoped, tag = 'scoped memory for attention_xml_forward.1']
    #allocation7 [shape = 's32[1]{0}', space=sflag, size = 0x4, scoped, tag = 'scoped memory for attention_xml_forward.1']
    #allocation8 [shape = 'u8[1024]{0}', space=vmem, size = 0x400, scoped, tag = 'output window, operand 0, single buffered']
    %8 = vsyncpa [#allocation6], 0
    %9 = vsyncpa [#allocation7], 0
    // Predicated region
    $region2: #{attention_xml_forward.1} parent=1 // pred_check
      _
    $region3: #{attention_xml_forward.1} parent=1 // pred_check_branch
      %11 = sbr.rel (0) target = $region5
    $region4: #{attention_xml_forward.1} parent=1 // pred_region
      %s13 = ssub.s32 11264, 11264
      %14 = vsyncadd [#allocation6], %s13
      %s15 = sshll.u32 [#allocation5], 4
      %s16 = int_to_ptr.vmem [resolvable:$true] %s15
      %21 = dma.hbm_to_vmem [thread:$0]  %s0, 11264, %s16, [#allocation6], 256, 256, 16
    $region5: #{attention_xml_forward.1} parent=1 // pred_fallthru
      _
    // Predicated region
    $region6: #{attention_xml_forward.1} parent=1 // pred_check
      _
    $region7: #{attention_xml_forward.1} parent=1 // pred_check_branch
      %23 = sbr.rel (0) target = $region9
    $region8: #{attention_xml_forward.1} parent=1 // pred_region
      _
    $region9: #{attention_xml_forward.1} parent=1 // pred_fallthru
      _
    // Predicated region
    $region10: #{attention_xml_forward.1} parent=1 // pred_check
      _
    $region11: #{attention_xml_forward.1} parent=1 // pred_check_branch
      %25 = sbr.rel (0) target = $region13
    $region12: #{attention_xml_forward.1} parent=1 // pred_region
      _
    $region13: #{attention_xml_forward.1} parent=1 // pred_fallthru
      _
    // Predicated region
    $region14: #{attention_xml_forward.1} parent=1 // pred_check
      _
    $region15: #{attention_xml_forward.1} parent=1 // pred_check_branch
      %27 = sbr.rel (0) target = $region17
    $region16: #{attention_xml_forward.1} parent=1 // pred_region
      %28 = dma.done [#allocation6], 11264
    $region17: #{attention_xml_forward.1} parent=1 // pred_fallthru
      _
    %v29 = vld [vmem:[%s1] sm:$0xff]
    %v30 = vld [vmem:[%s1 + $0x8] sm:$0xff]
    %v31 = vlaneseq
    %v32 = vand.u32 %v31, 127
    %vm33 = vcmp.lt.s32.totalorder %v32, 64
    %v34 = vadd.s32 %v29, 64
    %v35 = vadd.s32 %v30, 64
    %36 = vset.pattern.permute.xlu0 0
    %37 = vperm.xlu0 %36, %v29
    %v38 = vpop.permute.xlu0 %37
    %39 = vset.pattern.permute.xlu0 0
    %40 = vperm.xlu0 %39, %v30
    %v41 = vpop.permute.xlu0 %40
    %42 = vset.pattern.permute.xlu0 1
    %43 = vperm.xlu0 %42, %v34
    %v44 = vpop.permute.xlu0 %43
    %45 = vset.pattern.permute.xlu0 1
    %46 = vperm.xlu0 %45, %v35
    %v47 = vpop.permute.xlu0 %46
    %v48 = vsel %vm33, %v38, %v44
    %v49 = vsel %vm33, %v41, %v47
    %vm50 = vcmp.eq.s32.totalorder %v32, %v48
    %vm51 = vcmp.eq.s32.totalorder %v32, %v49
    %v52 = vsel %vm50, 1, 0
    %v53 = vsel %vm51, 1, 0
    %v54 = vcvt.s32.f32 %v52
    %v55 = vcvt.s32.f32 %v53
    %v56 = vld [vmem:[#allocation5] sm:$0xff]
    %v57 = vld [vmem:[#allocation5 + $0x8] sm:$0xff]
    %v58 = vld [vmem:[#allocation5 + $0x10] sm:$0xff]
    %v59 = vld [vmem:[#allocation5 + $0x18] sm:$0xff]
    %v60 = vld [vmem:[#allocation5 + $0x20] sm:$0xff]
    %v61 = vld [vmem:[#allocation5 + $0x28] sm:$0xff]
    %v62 = vld [vmem:[#allocation5 + $0x30] sm:$0xff]
    %v63 = vld [vmem:[#allocation5 + $0x38] sm:$0xff]
    %v64 = vld [vmem:[#allocation5 + $0x40] sm:$0xff]
    %v65 = vld [vmem:[#allocation5 + $0x48] sm:$0xff]
    %v66 = vld [vmem:[#allocation5 + $0x50] sm:$0xff]
    %v67 = vld [vmem:[#allocation5 + $0x58] sm:$0xff]
    %v68 = vld [vmem:[#allocation5 + $0x60] sm:$0xff]
    %v69 = vld [vmem:[#allocation5 + $0x68] sm:$0xff]
    %v70 = vld [vmem:[#allocation5 + $0x70] sm:$0xff]
    %v71 = vld [vmem:[#allocation5 + $0x78] sm:$0xff]
    %v72 = vld [vmem:[#allocation5 + $0x80] sm:$0xff]
    %v73 = vld [vmem:[#allocation5 + $0x88] sm:$0xff]
    %v74 = vld [vmem:[#allocation5 + $0x90] sm:$0xff]
    %v75 = vld [vmem:[#allocation5 + $0x98] sm:$0xff]
    %v76 = vld [vmem:[#allocation5 + $0xa0] sm:$0xff]
    %v77 = vld [vmem:[#allocation5 + $0xa8] sm:$0xff]
    %v78 = vld [vmem:[#allocation5 + $0xb0] sm:$0xff]
    %v79 = vld [vmem:[#allocation5 + $0xb8] sm:$0xff]
    %v80 = vld [vmem:[#allocation5 + $0xc0] sm:$0xff]
    %v81 = vld [vmem:[#allocation5 + $0xc8] sm:$0xff]
    %v82 = vld [vmem:[#allocation5 + $0xd0] sm:$0xff]
    %v83 = vld [vmem:[#allocation5 + $0xd8] sm:$0xff]
    %v84 = vld [vmem:[#allocation5 + $0xe0] sm:$0xff]
    %v85 = vld [vmem:[#allocation5 + $0xe8] sm:$0xff]
    %v86 = vld [vmem:[#allocation5 + $0xf0] sm:$0xff]
    %v87 = vld [vmem:[#allocation5 + $0xf8] sm:$0xff]
    %s88 = scalar_lea.vmem [#allocation5], 384
    %v89 = vld [vmem:[%s88] ss:$8 sm:$0x3]
    %v91 = vlaneseq
    %v92 = vshrl.u32 %v91, 7
    %v93 = vsub.s32 0, %v92
    %v94 = vrot.slane %v89, %v93
    %v95 = vlaneseq
    %v96 = vshrl.u32 %v95, 7
    %v97 = vsub.s32 1, %v96
    %v98 = vrot.slane %v89, %v97
    %101 = vmatprep.subr.mxu0 %v57
    %102 = vmatpush1.msra.mxu0 %v56
    %103 = vmatprep.subr.mxu0 %v59
    %104 = vmatpush1.msra.mxu0 %v58
    %105 = vmatprep.subr.mxu0 %v61
    %106 = vmatpush1.msra.mxu0 %v60
    %107 = vmatprep.subr.mxu0 %v63
    %108 = vmatpush1.msra.mxu0 %v62
    %109 = vmatprep.subr.mxu0 %v65
    %110 = vmatpush1.msra.mxu0 %v64
    %111 = vmatprep.subr.mxu0 %v67
    %112 = vmatpush1.msra.mxu0 %v66
    %113 = vmatprep.subr.mxu0 %v69
    %114 = vmatpush1.msra.mxu0 %v68
    %115 = vmatprep.subr.mxu0 %v71
    %116 = vmatpush1.msra.mxu0 %v70
    %117 = vmatprep.subr.mxu0 %v73
    %118 = vmatpush1.msra.mxu0 %v72
    %119 = vmatprep.subr.mxu0 %v75
    %120 = vmatpush1.msra.mxu0 %v74
    %121 = vmatprep.subr.mxu0 %v77
    %122 = vmatpush1.msra.mxu0 %v76
    %123 = vmatprep.subr.mxu0 %v79
    %124 = vmatpush1.msra.mxu0 %v78
    %125 = vmatprep.subr.mxu0 %v81
    %126 = vmatpush1.msra.mxu0 %v80
    %127 = vmatprep.subr.mxu0 %v83
    %128 = vmatpush1.msra.mxu0 %v82
    %129 = vmatprep.subr.mxu0 %v85
    %130 = vmatpush1.msra.mxu0 %v84
    %131 = vmatprep.subr.mxu0 %v87
    %132 = vmatpush1.msra.mxu0 %v86
    %133 = vmatprep.subr.mxu0 0.0
    %134 = vmatpush1.msra.mxu0 0.0
    %135 = vmatprep.subr.mxu0 0.0
    %136 = vmatpush1.msra.mxu0 0.0
    %137 = vmatprep.subr.mxu0 0.0
    %138 = vmatpush1.msra.mxu0 0.0
    %139 = vmatprep.subr.mxu0 0.0
    %140 = vmatpush1.msra.mxu0 0.0
    %141 = vmatprep.subr.mxu0 0.0
    %142 = vmatpush1.msra.mxu0 0.0
    %143 = vmatprep.subr.mxu0 0.0
    %144 = vmatpush1.msra.mxu0 0.0
    %145 = vmatprep.subr.mxu0 0.0
    %146 = vmatpush1.msra.mxu0 0.0
    %147 = vmatprep.subr.mxu0 0.0
    %148 = vmatpush1.msra.mxu0 0.0
    %149 = vmatprep.subr.mxu0 0.0
    %150 = vmatpush1.msra.mxu0 0.0
    %151 = vmatprep.subr.mxu0 0.0
    %152 = vmatpush1.msra.mxu0 0.0
    %153 = vmatprep.subr.mxu0 0.0
    %154 = vmatpush1.msra.mxu0 0.0
    %155 = vmatprep.subr.mxu0 0.0
    %156 = vmatpush1.msra.mxu0 0.0
    %157 = vmatprep.subr.mxu0 0.0
    %158 = vmatpush1.msra.mxu0 0.0
    %159 = vmatprep.subr.mxu0 0.0
    %160 = vmatpush1.msra.mxu0 0.0
    %161 = vmatprep.subr.mxu0 0.0
    %162 = vmatpush1.msra.mxu0 0.0
    %163 = vmatprep.subr.mxu0 0.0
    %164 = vmatpush1.msra.mxu0 0.0
    %165 = vmatprep.mubr.f32.mxu0 0.0
    %166 = vmatmul.mubr.f32.gmra.mrb[0].mxu0 %v54
    %v167 = vpop.f32.mrb[0].mxu0
    %v168 = vadd.f32 %v94, %v167
    %v169 = vpop.f32.mrb[0].mxu0
    %v170 = vadd.f32 %v98, %v169
    %171 = vmatprep.mubr.f32.mxu0 0.0
    %172 = vmatmul.mubr.f32.gmra.mrb[0].mxu0 %v55
    %v173 = vpop.f32.mrb[0].mxu0
    %v174 = vadd.f32 %v94, %v173
    %v175 = vpop.f32.mrb[0].mxu0
    %v176 = vadd.f32 %v98, %v175
    %177 = vdwg.mxu0
    %178 = vst [vmem:[#allocation2] sm:$0xff] %v168
    %179 = vst [vmem:[#allocation2 + $0x8] sm:$0xff] %v170
    %180 = vst [vmem:[#allocation2 + $0x10] sm:$0xff] %v174
    %181 = vst [vmem:[#allocation2 + $0x18] sm:$0xff] %v176
    %vm182 = vcmp.ne.s32.totalorder %v29, 0
    %vm183 = vcmp.ne.s32.totalorder %v30, 0
    %v184 = vsel %vm182, 1, 0
    %v185 = vsel %vm183, 1, 0
    %v186 = vcvt.s32.f32 %v184
    %v187 = vcvt.s32.f32 %v185
    %vm188 = vcmp.lt.s32.totalorder %v32, 32
    %190 = vset.pattern.permute.xlu0 0
    %191 = vperm.xlu0 %190, %v186
    %v192 = vpop.permute.xlu0 %191
    %195 = vset.pattern.permute.xlu0 0
    %196 = vperm.xlu0 %195, %v187
    %v197 = vpop.permute.xlu0 %196
    %199 = vset.pattern.permute.xlu0 1
    %200 = vperm.xlu0 %199, %v186
    %v201 = vpop.permute.xlu0 %200
    %203 = vset.pattern.permute.xlu0 1
    %204 = vperm.xlu0 %203, %v187
    %v205 = vpop.permute.xlu0 %204
    %v207 = vsel %vm188, %v192, %v201
    %v208 = vsel %vm188, %v197, %v205
    %vm209 = vcmask 523264
    %210 = vst.msk [vmem:[#allocation3] sm:$0xff] %vm209, %v207
    %211 = vst.msk [vmem:[#allocation3 + $0x8] sm:$0xff] %vm209, %v208
    %v212 = vld [vmem:[#allocation5 + $0x100] sm:$0xff]
    %v213 = vld [vmem:[#allocation5 + $0x108] sm:$0xff]
    %v214 = vld [vmem:[#allocation5 + $0x110] sm:$0xff]
    %v215 = vld [vmem:[#allocation5 + $0x118] sm:$0xff]
    %v216 = vld [vmem:[#allocation5 + $0x120] sm:$0xff]
    %v217 = vld [vmem:[#allocation5 + $0x128] sm:$0xff]
    %v218 = vld [vmem:[#allocation5 + $0x130] sm:$0xff]
    %v219 = vld [vmem:[#allocation5 + $0x138] sm:$0xff]
    %v220 = vld [vmem:[#allocation5 + $0x140] sm:$0xff]
    %v221 = vld [vmem:[#allocation5 + $0x148] sm:$0xff]
    %v222 = vld [vmem:[#allocation5 + $0x150] sm:$0xff]
    %v223 = vld [vmem:[#allocation5 + $0x158] sm:$0xff]
    %v224 = vld [vmem:[#allocation5 + $0x160] sm:$0xff]
    %v225 = vld [vmem:[#allocation5 + $0x168] sm:$0xff]
    %v226 = vld [vmem:[#allocation5 + $0x170] sm:$0xff]
    %v227 = vld [vmem:[#allocation5 + $0x178] sm:$0xff]
    %v228 = vld [vmem:[#allocation2] sm:$0x3]
    %v229 = vld [vmem:[#allocation2 + $0x8] sm:$0x3]
    %v231 = vsel %vm209, 0.0, 0
    %233 = vmatprep.subr.mxu0 %v213
    %234 = vmatpush1.msra.mxu0 %v212
    %235 = vmatprep.subr.mxu0 %v215
    %236 = vmatpush1.msra.mxu0 %v214
    %237 = vmatprep.subr.mxu0 %v217
    %238 = vmatpush1.msra.mxu0 %v216
    %239 = vmatprep.subr.mxu0 %v219
    %240 = vmatpush1.msra.mxu0 %v218
    %241 = vmatprep.subr.mxu0 %v221
    %242 = vmatpush1.msra.mxu0 %v220
    %243 = vmatprep.subr.mxu0 %v223
    %244 = vmatpush1.msra.mxu0 %v222
    %245 = vmatprep.subr.mxu0 %v225
    %246 = vmatpush1.msra.mxu0 %v224
    %247 = vmatprep.subr.mxu0 %v227
    %248 = vmatpush1.msra.mxu0 %v226
    %249 = vmatprep.subr.mxu0 0.0
    %250 = vmatpush1.msra.mxu0 0.0
    %251 = vmatprep.subr.mxu0 0.0
    %252 = vmatpush1.msra.mxu0 0.0
    %253 = vmatprep.subr.mxu0 0.0
    %254 = vmatpush1.msra.mxu0 0.0
    %255 = vmatprep.subr.mxu0 0.0
    %256 = vmatpush1.msra.mxu0 0.0
    %257 = vmatprep.subr.mxu0 0.0
    %258 = vmatpush1.msra.mxu0 0.0
    %259 = vmatprep.subr.mxu0 0.0
    %260 = vmatpush1.msra.mxu0 0.0
    %261 = vmatprep.subr.mxu0 0.0
    %262 = vmatpush1.msra.mxu0 0.0
    %263 = vmatprep.subr.mxu0 0.0
    %264 = vmatpush1.msra.mxu0 0.0
    %265 = vmatprep.subr.mxu0 0.0
    %266 = vmatpush1.msra.mxu0 0.0
    %267 = vmatprep.subr.mxu0 0.0
    %268 = vmatpush1.msra.mxu0 0.0
    %269 = vmatprep.subr.mxu0 0.0
    %270 = vmatpush1.msra.mxu0 0.0
    %271 = vmatprep.subr.mxu0 0.0
    %272 = vmatpush1.msra.mxu0 0.0
    %273 = vmatprep.subr.mxu0 0.0
    %274 = vmatpush1.msra.mxu0 0.0
    %275 = vmatprep.subr.mxu0 0.0
    %276 = vmatpush1.msra.mxu0 0.0
    %277 = vmatprep.subr.mxu0 0.0
    %278 = vmatpush1.msra.mxu0 0.0
    %279 = vmatprep.subr.mxu0 0.0
    %280 = vmatpush1.msra.mxu0 0.0
    %281 = vmatprep.subr.mxu0 0.0
    %282 = vmatpush1.msra.mxu0 0.0
    %283 = vmatprep.subr.mxu0 0.0
    %284 = vmatpush1.msra.mxu0 0.0
    %285 = vmatprep.subr.mxu0 0.0
    %286 = vmatpush1.msra.mxu0 0.0
    %287 = vmatprep.subr.mxu0 0.0
    %288 = vmatpush1.msra.mxu0 0.0
    %289 = vmatprep.subr.mxu0 0.0
    %290 = vmatpush1.msra.mxu0 0.0
    %291 = vmatprep.subr.mxu0 0.0
    %292 = vmatpush1.msra.mxu0 0.0
    %293 = vmatprep.subr.mxu0 0.0
    %294 = vmatpush1.msra.mxu0 0.0
    %295 = vmatprep.subr.mxu0 0.0
    %296 = vmatpush1.msra.mxu0 0.0
    %297 = vmatprep.mubr.f32.mxu0 0.0
    %298 = vmatmul.mubr.f32.gmra.mrb[0].mxu0 %v231
    %v299 = vpop.f32.mrb[0].mxu0
    %v300 = vadd.f32 0.0, %v299
    %v301 = vpop.f32.mrb[0].mxu0
    %v302 = vadd.f32 0.0, %v301
    %303 = vdwg.mxu0
    %v304 = vadd.f32 %v228, %v300
    %v305 = vadd.f32 %v229, %v302
    %v306 = vxor.u32 %v304, 2147483648
    %v307 = vxor.u32 %v305, 2147483648
    %v308 = vmul.f32 %v306, 1.442695
    %v309 = vpow.pop %v308
    %v310 = vmul.f32 %v307, 1.442695
    %v311 = vpow.pop %v310
    %v312 = vadd.f32 %v309, 1.0
    %v313 = vadd.f32 %v311, 1.0
    %v314 = vrcp.pop %v312
    %v315 = vmul.f32 1.0, %v314
    %v316 = vrcp.pop %v313
    %v317 = vmul.f32 1.0, %v316
    %v318 = vtanh.pop %v305
    %v319 = vmul.f32 %v315, 0.0
    %v320 = vmul.f32 %v315, %v318
    %322 = vrot.lane.b32.xlu0 %v320, 64
    %v323 = vpop.permute.xlu0 %322
    %v325 = vadd.f32 %v319, %v323
    %v326 = vtanh.pop %v325
    %v327 = vmul.f32 %v317, %v326
    %v328 = vld [vmem:[#allocation3] sm:$0x3]
    %vm329 = vcmp.gt.f32.partialorder %v328, 0.5
    %331 = vrot.lane.b32.xlu0 %v327, 64
    %v332 = vpop.permute.xlu0 %331
    %v334 = vsel %vm329, %v332, 0.0
    %336 = vrot.lane.b32.xlu0 %v325, 64
    %v337 = vpop.permute.xlu0 %336
    %v339 = vsel %vm329, %v337, 0.0
    %v340 = vmul.f32 %v334, %v328
    %v343 = vunpack.c.l.s4 1966171168
    %v344 = vunpack.c.0.s8 %v343
    %v345 = vlaneseq
    %v346 = vshrl.u32 %v345, 7
    %v347 = vsub.s32 %v344, %v346
    %v348 = vrot.slane %v340, %v347
    %v349 = vcombine.high %v348, %v348
    %v351 = vunpack.c.l.s4 1966171168
    %v352 = vunpack.c.0.s8 %v351
    %v353 = vlaneseq
    %v354 = vshrl.u32 %v353, 7
    %v355 = vsub.s32 %v352, %v354
    %v356 = vrot.slane %v348, %v355
    %v358 = vunpack.c.l.s4 1966171168
    %v359 = vunpack.c.0.s8 %v358
    %v360 = vlaneseq
    %v361 = vshrl.u32 %v360, 7
    %v362 = vsub.s32 %v359, %v361
    %v363 = vrot.slane %v349, %v362
    %vm366 = vcmask 253952
    %367 = vst.msk [vmem:[#allocation4] sm:$0x1] %vm366, %v356
    %368 = vst.msk [vmem:[#allocation4 + $0x8] sm:$0x1] %vm366, %v363
    %vm369 = vcmask 516352
    %370 = vst.msk [vmem:[#allocation4 + $0x7] sm:$0x1] %vm369, %v356
    %371 = vst.msk [vmem:[#allocation4 + $0xf] sm:$0x1] %vm369, %v363
    %v372 = vld [vmem:[#allocation2] sm:$0xc]
    %v373 = vld [vmem:[#allocation2 + $0x8] sm:$0xc]
    %v375 = vsel %vm209, %v334, 0
    %377 = vmatprep.subr.mxu0 %v213
    %378 = vmatpush1.msra.mxu0 %v212
    %379 = vmatprep.subr.mxu0 %v215
    %380 = vmatpush1.msra.mxu0 %v214
    %381 = vmatprep.subr.mxu0 %v217
    %382 = vmatpush1.msra.mxu0 %v216
    %383 = vmatprep.subr.mxu0 %v219
    %384 = vmatpush1.msra.mxu0 %v218
    %385 = vmatprep.subr.mxu0 %v221
    %386 = vmatpush1.msra.mxu0 %v220
    %387 = vmatprep.subr.mxu0 %v223
    %388 = vmatpush1.msra.mxu0 %v222
    %389 = vmatprep.subr.mxu0 %v225
    %390 = vmatpush1.msra.mxu0 %v224
    %391 = vmatprep.subr.mxu0 %v227
    %392 = vmatpush1.msra.mxu0 %v226
    %393 = vmatprep.subr.mxu0 0.0
    %394 = vmatpush1.msra.mxu0 0.0
    %395 = vmatprep.subr.mxu0 0.0
    %396 = vmatpush1.msra.mxu0 0.0
    %397 = vmatprep.subr.mxu0 0.0
    %398 = vmatpush1.msra.mxu0 0.0
    %399 = vmatprep.subr.mxu0 0.0
    %400 = vmatpush1.msra.mxu0 0.0
    %401 = vmatprep.subr.mxu0 0.0
    %402 = vmatpush1.msra.mxu0 0.0
    %403 = vmatprep.subr.mxu0 0.0
    %404 = vmatpush1.msra.mxu0 0.0
    %405 = vmatprep.subr.mxu0 0.0
    %406 = vmatpush1.msra.mxu0 0.0
    %407 = vmatprep.subr.mxu0 0.0
    %408 = vmatpush1.msra.mxu0 0.0
    %409 = vmatprep.subr.mxu0 0.0
    %410 = vmatpush1.msra.mxu0 0.0
    %411 = vmatprep.subr.mxu0 0.0
    %412 = vmatpush1.msra.mxu0 0.0
    %413 = vmatprep.subr.mxu0 0.0
    %414 = vmatpush1.msra.mxu0 0.0
    %415 = vmatprep.subr.mxu0 0.0
    %416 = vmatpush1.msra.mxu0 0.0
    %417 = vmatprep.subr.mxu0 0.0
    %418 = vmatpush1.msra.mxu0 0.0
    %419 = vmatprep.subr.mxu0 0.0
    %420 = vmatpush1.msra.mxu0 0.0
    %421 = vmatprep.subr.mxu0 0.0
    %422 = vmatpush1.msra.mxu0 0.0
    %423 = vmatprep.subr.mxu0 0.0
    %424 = vmatpush1.msra.mxu0 0.0
    %425 = vmatprep.subr.mxu0 0.0
    %426 = vmatpush1.msra.mxu0 0.0
    %427 = vmatprep.subr.mxu0 0.0
    %428 = vmatpush1.msra.mxu0 0.0
    %429 = vmatprep.subr.mxu0 0.0
    %430 = vmatpush1.msra.mxu0 0.0
    %431 = vmatprep.subr.mxu0 0.0
    %432 = vmatpush1.msra.mxu0 0.0
    %433 = vmatprep.subr.mxu0 0.0
    %434 = vmatpush1.msra.mxu0 0.0
    %435 = vmatprep.subr.mxu0 0.0
    %436 = vmatpush1.msra.mxu0 0.0
    %437 = vmatprep.subr.mxu0 0.0
    %438 = vmatpush1.msra.mxu0 0.0
    %439 = vmatprep.subr.mxu0 0.0
    %440 = vmatpush1.msra.mxu0 0.0
    %441 = vmatprep.mubr.f32.mxu0 0.0
    %442 = vmatmul.mubr.f32.gmra.mrb[0].mxu0 %v375
    %v443 = vpop.f32.mrb[0].mxu0
    %v444 = vadd.f32 0.0, %v443
    %v445 = vpop.f32.mrb[0].mxu0
    %v446 = vadd.f32 0.0, %v445
    %447 = vdwg.mxu0
    %v450 = vrot.slane %v444, 6
    %v451 = vrot.slane %v446, 6
    %v454 = vadd.f32 %v372, %v450
    %v455 = vadd.f32 %v373, %v451
    %v456 = vxor.u32 %v454, 2147483648
    %v457 = vxor.u32 %v455, 2147483648
    %v458 = vmul.f32 %v456, 1.442695
    %v459 = vpow.pop %v458
    %v460 = vmul.f32 %v457, 1.442695
    %v461 = vpow.pop %v460
    %v462 = vadd.f32 %v459, 1.0
    %v463 = vadd.f32 %v461, 1.0
    %v464 = vrcp.pop %v462
    %v465 = vmul.f32 1.0, %v464
    %v466 = vrcp.pop %v463
    %v467 = vmul.f32 1.0, %v466
    %v468 = vtanh.pop %v455
    %v470 = vrot.slane %v339, 6
    %471 = vrot.lane.b32.xlu0 %v470, 64
    %v472 = vpop.permute.xlu0 %471
    %v474 = vmul.f32 %v465, %v472
    %v475 = vmul.f32 %v465, %v468
    %477 = vrot.lane.b32.xlu0 %v475, 64
    %v478 = vpop.permute.xlu0 %477
    %v480 = vadd.f32 %v474, %v478
    %v481 = vtanh.pop %v480
    %v482 = vmul.f32 %v467, %v481
    %v483 = vld [vmem:[#allocation3 + $0x2] sm:$0x3]
    %vm484 = vcmp.gt.f32.partialorder %v483, 0.5
    %v486 = vrot.slane %v482, 2
    %487 = vrot.lane.b32.xlu0 %v486, 64
    %v488 = vpop.permute.xlu0 %487
    %v490 = vsel %vm484, %v488, %v334
    %v492 = vrot.slane %v480, 2
    %493 = vrot.lane.b32.xlu0 %v492, 64
    %v494 = vpop.permute.xlu0 %493
    %v496 = vsel %vm484, %v494, %v339
    %v497 = vmul.f32 %v490, %v483
    %v500 = vunpack.c.l.s4 1966171168
    %v501 = vunpack.c.0.s8 %v500
    %v502 = vlaneseq
    %v503 = vshrl.u32 %v502, 7
    %v504 = vsub.s32 %v501, %v503
    %v505 = vrot.slane %v497, %v504
    %v506 = vcombine.high %v505, %v505
    %v508 = vunpack.c.l.s4 1966171168
    %v509 = vunpack.c.0.s8 %v508
    %v510 = vlaneseq
    %v511 = vshrl.u32 %v510, 7
    %v512 = vsub.s32 %v509, %v511
    %v513 = vrot.slane %v505, %v512
    %v515 = vunpack.c.l.s4 1966171168
    %v516 = vunpack.c.0.s8 %v515
    %v517 = vlaneseq
    %v518 = vshrl.u32 %v517, 7
    %v519 = vsub.s32 %v516, %v518
    %v520 = vrot.slane %v506, %v519
    %523 = vst.msk [vmem:[#allocation4 + $0x1] sm:$0x1] %vm366, %v513
    %524 = vst.msk [vmem:[#allocation4 + $0x9] sm:$0x1] %vm366, %v520
    %525 = vst.msk [vmem:[#allocation4 + $0x6] sm:$0x1] %vm369, %v513
    %526 = vst.msk [vmem:[#allocation4 + $0xe] sm:$0x1] %vm369, %v520
    %v527 = vld [vmem:[#allocation2] sm:$0x30]
    %v528 = vld [vmem:[#allocation2 + $0x8] sm:$0x30]
    %v530 = vsel %vm209, %v490, 0
    %532 = vmatprep.subr.mxu0 %v213
    %533 = vmatpush1.msra.mxu0 %v212
    %534 = vmatprep.subr.mxu0 %v215
    %535 = vmatpush1.msra.mxu0 %v214
    %536 = vmatprep.subr.mxu0 %v217
    %537 = vmatpush1.msra.mxu0 %v216
    %538 = vmatprep.subr.mxu0 %v219
    %539 = vmatpush1.msra.mxu0 %v218
    %540 = vmatprep.subr.mxu0 %v221
    %541 = vmatpush1.msra.mxu0 %v220
    %542 = vmatprep.subr.mxu0 %v223
    %543 = vmatpush1.msra.mxu0 %v222
    %544 = vmatprep.subr.mxu0 %v225
    %545 = vmatpush1.msra.mxu0 %v224
    %546 = vmatprep.subr.mxu0 %v227
    %547 = vmatpush1.msra.mxu0 %v226
    %548 = vmatprep.subr.mxu0 0.0
    %549 = vmatpush1.msra.mxu0 0.0
    %550 = vmatprep.subr.mxu0 0.0
    %551 = vmatpush1.msra.mxu0 0.0
    %552 = vmatprep.subr.mxu0 0.0
    %553 = vmatpush1.msra.mxu0 0.0
    %554 = vmatprep.subr.mxu0 0.0
    %555 = vmatpush1.msra.mxu0 0.0
    %556 = vmatprep.subr.mxu0 0.0
    %557 = vmatpush1.msra.mxu0 0.0
    %558 = vmatprep.subr.mxu0 0.0
    %559 = vmatpush1.msra.mxu0 0.0
    %560 = vmatprep.subr.mxu0 0.0
    %561 = vmatpush1.msra.mxu0 0.0
    %562 = vmatprep.subr.mxu0 0.0
    %563 = vmatpush1.msra.mxu0 0.0
    %564 = vmatprep.subr.mxu0 0.0
    %565 = vmatpush1.msra.mxu0 0.0
    %566 = vmatprep.subr.mxu0 0.0
    %567 = vmatpush1.msra.mxu0 0.0
    %568 = vmatprep.subr.mxu0 0.0
    %569 = vmatpush1.msra.mxu0 0.0
    %570 = vmatprep.subr.mxu0 0.0
    %571 = vmatpush1.msra.mxu0 0.0
    %572 = vmatprep.subr.mxu0 0.0
    %573 = vmatpush1.msra.mxu0 0.0
    %574 = vmatprep.subr.mxu0 0.0
    %575 = vmatpush1.msra.mxu0 0.0
    %576 = vmatprep.subr.mxu0 0.0
    %577 = vmatpush1.msra.mxu0 0.0
    %578 = vmatprep.subr.mxu0 0.0
    %579 = vmatpush1.msra.mxu0 0.0
    %580 = vmatprep.subr.mxu0 0.0
    %581 = vmatpush1.msra.mxu0 0.0
    %582 = vmatprep.subr.mxu0 0.0
    %583 = vmatpush1.msra.mxu0 0.0
    %584 = vmatprep.subr.mxu0 0.0
    %585 = vmatpush1.msra.mxu0 0.0
    %586 = vmatprep.subr.mxu0 0.0
    %587 = vmatpush1.msra.mxu0 0.0
    %588 = vmatprep.subr.mxu0 0.0
    %589 = vmatpush1.msra.mxu0 0.0
    %590 = vmatprep.subr.mxu0 0.0
    %591 = vmatpush1.msra.mxu0 0.0
    %592 = vmatprep.subr.mxu0 0.0
    %593 = vmatpush1.msra.mxu0 0.0
    %594 = vmatprep.subr.mxu0 0.0
    %595 = vmatpush1.msra.mxu0 0.0
    %596 = vmatprep.mubr.f32.mxu0 0.0
    %597 = vmatmul.mubr.f32.gmra.mrb[0].mxu0 %v530
    %v598 = vpop.f32.mrb[0].mxu0
    %v599 = vadd.f32 0.0, %v598
    %v600 = vpop.f32.mrb[0].mxu0
    %v601 = vadd.f32 0.0, %v600
    %602 = vdwg.mxu0
    %v605 = vrot.slane %v599, 4
    %v606 = vrot.slane %v601, 4
    %v609 = vadd.f32 %v527, %v605
    %v610 = vadd.f32 %v528, %v606
    %v611 = vxor.u32 %v609, 2147483648
    %v612 = vxor.u32 %v610, 2147483648
    %v613 = vmul.f32 %v611, 1.442695
    %v614 = vpow.pop %v613
    %v615 = vmul.f32 %v612, 1.442695
    %v616 = vpow.pop %v615
    %v617 = vadd.f32 %v614, 1.0
    %v618 = vadd.f32 %v616, 1.0
    %v619 = vrcp.pop %v617
    %v620 = vmul.f32 1.0, %v619
    %v621 = vrcp.pop %v618
    %v622 = vmul.f32 1.0, %v621
    %v623 = vtanh.pop %v610
    %v625 = vrot.slane %v496, 4
    %626 = vrot.lane.b32.xlu0 %v625, 64
    %v627 = vpop.permute.xlu0 %626
    %v629 = vmul.f32 %v620, %v627
    %v630 = vmul.f32 %v620, %v623
    %632 = vrot.lane.b32.xlu0 %v630, 64
    %v633 = vpop.permute.xlu0 %632
    %v635 = vadd.f32 %v629, %v633
    %v636 = vtanh.pop %v635
    %v637 = vmul.f32 %v622, %v636
    %v638 = vld [vmem:[#allocation3 + $0x4] sm:$0x3]
    %vm639 = vcmp.gt.f32.partialorder %v638, 0.5
    %v641 = vrot.slane %v637, 4
    %642 = vrot.lane.b32.xlu0 %v641, 64
    %v643 = vpop.permute.xlu0 %642
    %v645 = vsel %vm639, %v643, %v490
    %v647 = vrot.slane %v635, 4
    %648 = vrot.lane.b32.xlu0 %v647, 64
    %v649 = vpop.permute.xlu0 %648
    %v651 = vsel %vm639, %v649, %v496
    %v652 = vmul.f32 %v645, %v638
    %v655 = vunpack.c.l.s4 1966171168
    %v656 = vunpack.c.0.s8 %v655
    %v657 = vlaneseq
    %v658 = vshrl.u32 %v657, 7
    %v659 = vsub.s32 %v656, %v658
    %v660 = vrot.slane %v652, %v659
    %v661 = vcombine.high %v660, %v660
    %v663 = vunpack.c.l.s4 1966171168
    %v664 = vunpack.c.0.s8 %v663
    %v665 = vlaneseq
    %v666 = vshrl.u32 %v665, 7
    %v667 = vsub.s32 %v664, %v666
    %v668 = vrot.slane %v660, %v667
    %v670 = vunpack.c.l.s4 1966171168
    %v671 = vunpack.c.0.s8 %v670
    %v672 = vlaneseq
    %v673 = vshrl.u32 %v672, 7
    %v674 = vsub.s32 %v671, %v673
    %v675 = vrot.slane %v661, %v674
    %678 = vst.msk [vmem:[#allocation4 + $0x2] sm:$0x1] %vm366, %v668
    %679 = vst.msk [vmem:[#allocation4 + $0xa] sm:$0x1] %vm366, %v675
    %680 = vst.msk [vmem:[#allocation4 + $0x5] sm:$0x1] %vm369, %v668
    %681 = vst.msk [vmem:[#allocation4 + $0xd] sm:$0x1] %vm369, %v675
    %v682 = vld [vmem:[#allocation2] sm:$0xc0]
    %v683 = vld [vmem:[#allocation2 + $0x8] sm:$0xc0]
    %v685 = vsel %vm209, %v645, 0
    %687 = vmatprep.subr.mxu0 %v213
    %688 = vmatpush1.msra.mxu0 %v212
    %689 = vmatprep.subr.mxu0 %v215
    %690 = vmatpush1.msra.mxu0 %v214
    %691 = vmatprep.subr.mxu0 %v217
    %692 = vmatpush1.msra.mxu0 %v216
    %693 = vmatprep.subr.mxu0 %v219
    %694 = vmatpush1.msra.mxu0 %v218
    %695 = vmatprep.subr.mxu0 %v221
    %696 = vmatpush1.msra.mxu0 %v220
    %697 = vmatprep.subr.mxu0 %v223
    %698 = vmatpush1.msra.mxu0 %v222
    %699 = vmatprep.subr.mxu0 %v225
    %700 = vmatpush1.msra.mxu0 %v224
    %701 = vmatprep.subr.mxu0 %v227
    %702 = vmatpush1.msra.mxu0 %v226
    %703 = vmatprep.subr.mxu0 0.0
    %704 = vmatpush1.msra.mxu0 0.0
    %705 = vmatprep.subr.mxu0 0.0
    %706 = vmatpush1.msra.mxu0 0.0
    %707 = vmatprep.subr.mxu0 0.0
    %708 = vmatpush1.msra.mxu0 0.0
    %709 = vmatprep.subr.mxu0 0.0
    %710 = vmatpush1.msra.mxu0 0.0
    %711 = vmatprep.subr.mxu0 0.0
    %712 = vmatpush1.msra.mxu0 0.0
    %713 = vmatprep.subr.mxu0 0.0
    %714 = vmatpush1.msra.mxu0 0.0
    %715 = vmatprep.subr.mxu0 0.0
    %716 = vmatpush1.msra.mxu0 0.0
    %717 = vmatprep.subr.mxu0 0.0
    %718 = vmatpush1.msra.mxu0 0.0
    %719 = vmatprep.subr.mxu0 0.0
    %720 = vmatpush1.msra.mxu0 0.0
    %721 = vmatprep.subr.mxu0 0.0
    %722 = vmatpush1.msra.mxu0 0.0
    %723 = vmatprep.subr.mxu0 0.0
    %724 = vmatpush1.msra.mxu0 0.0
    %725 = vmatprep.subr.mxu0 0.0
    %726 = vmatpush1.msra.mxu0 0.0
    %727 = vmatprep.subr.mxu0 0.0
    %728 = vmatpush1.msra.mxu0 0.0
    %729 = vmatprep.subr.mxu0 0.0
    %730 = vmatpush1.msra.mxu0 0.0
    %731 = vmatprep.subr.mxu0 0.0
    %732 = vmatpush1.msra.mxu0 0.0
    %733 = vmatprep.subr.mxu0 0.0
    %734 = vmatpush1.msra.mxu0 0.0
    %735 = vmatprep.subr.mxu0 0.0
    %736 = vmatpush1.msra.mxu0 0.0
    %737 = vmatprep.subr.mxu0 0.0
    %738 = vmatpush1.msra.mxu0 0.0
    %739 = vmatprep.subr.mxu0 0.0
    %740 = vmatpush1.msra.mxu0 0.0
    %741 = vmatprep.subr.mxu0 0.0
    %742 = vmatpush1.msra.mxu0 0.0
    %743 = vmatprep.subr.mxu0 0.0
    %744 = vmatpush1.msra.mxu0 0.0
    %745 = vmatprep.subr.mxu0 0.0
    %746 = vmatpush1.msra.mxu0 0.0
    %747 = vmatprep.subr.mxu0 0.0
    %748 = vmatpush1.msra.mxu0 0.0
    %749 = vmatprep.subr.mxu0 0.0
    %750 = vmatpush1.msra.mxu0 0.0
    %751 = vmatprep.mubr.f32.mxu0 0.0
    %752 = vmatmul.mubr.f32.gmra.mrb[0].mxu0 %v685
    %v753 = vpop.f32.mrb[0].mxu0
    %v754 = vadd.f32 0.0, %v753
    %v755 = vpop.f32.mrb[0].mxu0
    %v756 = vadd.f32 0.0, %v755
    %757 = vdwg.mxu0
    %v760 = vrot.slane %v754, 2
    %v761 = vrot.slane %v756, 2
    %v764 = vadd.f32 %v682, %v760
    %v765 = vadd.f32 %v683, %v761
    %v766 = vxor.u32 %v764, 2147483648
    %v767 = vxor.u32 %v765, 2147483648
    %v768 = vmul.f32 %v766, 1.442695
    %v769 = vpow.pop %v768
    %v770 = vmul.f32 %v767, 1.442695
    %v771 = vpow.pop %v770
    %v772 = vadd.f32 %v769, 1.0
    %v773 = vadd.f32 %v771, 1.0
    %v774 = vrcp.pop %v772
    %v775 = vmul.f32 1.0, %v774
    %v776 = vrcp.pop %v773
    %v777 = vmul.f32 1.0, %v776
    %v778 = vtanh.pop %v765
    %v780 = vrot.slane %v651, 2
    %781 = vrot.lane.b32.xlu0 %v780, 64
    %v782 = vpop.permute.xlu0 %781
    %v784 = vmul.f32 %v775, %v782
    %v785 = vmul.f32 %v775, %v778
    %787 = vrot.lane.b32.xlu0 %v785, 64
    %v788 = vpop.permute.xlu0 %787
    %v790 = vadd.f32 %v784, %v788
    %v791 = vtanh.pop %v790
    %v792 = vmul.f32 %v777, %v791
    %v793 = vld [vmem:[#allocation3 + $0x6] sm:$0x3]
    %vm794 = vcmp.gt.f32.partialorder %v793, 0.5
    %v796 = vrot.slane %v792, 6
    %797 = vrot.lane.b32.xlu0 %v796, 64
    %v798 = vpop.permute.xlu0 %797
    %v800 = vsel %vm794, %v798, %v645
    %v802 = vrot.slane %v790, 6
    %803 = vrot.lane.b32.xlu0 %v802, 64
    %v804 = vpop.permute.xlu0 %803
    %v806 = vsel %vm794, %v804, %v651
    %v807 = vmul.f32 %v800, %v793
    %v810 = vunpack.c.l.s4 1966171168
    %v811 = vunpack.c.0.s8 %v810
    %v812 = vlaneseq
    %v813 = vshrl.u32 %v812, 7
    %v814 = vsub.s32 %v811, %v813
    %v815 = vrot.slane %v807, %v814
    %v816 = vcombine.high %v815, %v815
    %v818 = vunpack.c.l.s4 1966171168
    %v819 = vunpack.c.0.s8 %v818
    %v820 = vlaneseq
    %v821 = vshrl.u32 %v820, 7
    %v822 = vsub.s32 %v819, %v821
    %v823 = vrot.slane %v815, %v822
    %v825 = vunpack.c.l.s4 1966171168
    %v826 = vunpack.c.0.s8 %v825
    %v827 = vlaneseq
    %v828 = vshrl.u32 %v827, 7
    %v829 = vsub.s32 %v826, %v828
    %v830 = vrot.slane %v816, %v829
    %833 = vst.msk [vmem:[#allocation4 + $0x3] sm:$0x1] %vm366, %v823
    %834 = vst.msk [vmem:[#allocation4 + $0xb] sm:$0x1] %vm366, %v830
    %835 = vst.msk [vmem:[#allocation4 + $0x4] sm:$0x1] %vm369, %v823
    %836 = vst.msk [vmem:[#allocation4 + $0xc] sm:$0x1] %vm369, %v830
    %v837 = vld [vmem:[#allocation2 + $0x10] sm:$0x3]
    %v838 = vld [vmem:[#allocation2 + $0x18] sm:$0x3]
    %v840 = vsel %vm209, %v800, 0
    %842 = vmatprep.subr.mxu0 %v213
    %843 = vmatpush1.msra.mxu0 %v212
    %844 = vmatprep.subr.mxu0 %v215
    %845 = vmatpush1.msra.mxu0 %v214
    %846 = vmatprep.subr.mxu0 %v217
    %847 = vmatpush1.msra.mxu0 %v216
    %848 = vmatprep.subr.mxu0 %v219
    %849 = vmatpush1.msra.mxu0 %v218
    %850 = vmatprep.subr.mxu0 %v221
    %851 = vmatpush1.msra.mxu0 %v220
    %852 = vmatprep.subr.mxu0 %v223
    %853 = vmatpush1.msra.mxu0 %v222
    %854 = vmatprep.subr.mxu0 %v225
    %855 = vmatpush1.msra.mxu0 %v224
    %856 = vmatprep.subr.mxu0 %v227
    %857 = vmatpush1.msra.mxu0 %v226
    %858 = vmatprep.subr.mxu0 0.0
    %859 = vmatpush1.msra.mxu0 0.0
    %860 = vmatprep.subr.mxu0 0.0
    %861 = vmatpush1.msra.mxu0 0.0
    %862 = vmatprep.subr.mxu0 0.0
    %863 = vmatpush1.msra.mxu0 0.0
    %864 = vmatprep.subr.mxu0 0.0
    %865 = vmatpush1.msra.mxu0 0.0
    %866 = vmatprep.subr.mxu0 0.0
    %867 = vmatpush1.msra.mxu0 0.0
    %868 = vmatprep.subr.mxu0 0.0
    %869 = vmatpush1.msra.mxu0 0.0
    %870 = vmatprep.subr.mxu0 0.0
    %871 = vmatpush1.msra.mxu0 0.0
    %872 = vmatprep.subr.mxu0 0.0
    %873 = vmatpush1.msra.mxu0 0.0
    %874 = vmatprep.subr.mxu0 0.0
    %875 = vmatpush1.msra.mxu0 0.0
    %876 = vmatprep.subr.mxu0 0.0
    %877 = vmatpush1.msra.mxu0 0.0
    %878 = vmatprep.subr.mxu0 0.0
    %879 = vmatpush1.msra.mxu0 0.0
    %880 = vmatprep.subr.mxu0 0.0
    %881 = vmatpush1.msra.mxu0 0.0
    %882 = vmatprep.subr.mxu0 0.0
    %883 = vmatpush1.msra.mxu0 0.0
    %884 = vmatprep.subr.mxu0 0.0
    %885 = vmatpush1.msra.mxu0 0.0
    %886 = vmatprep.subr.mxu0 0.0
    %887 = vmatpush1.msra.mxu0 0.0
    %888 = vmatprep.subr.mxu0 0.0
    %889 = vmatpush1.msra.mxu0 0.0
    %890 = vmatprep.subr.mxu0 0.0
    %891 = vmatpush1.msra.mxu0 0.0
    %892 = vmatprep.subr.mxu0 0.0
    %893 = vmatpush1.msra.mxu0 0.0
    %894 = vmatprep.subr.mxu0 0.0
    %895 = vmatpush1.msra.mxu0 0.0
    %896 = vmatprep.subr.mxu0 0.0
    %897 = vmatpush1.msra.mxu0 0.0
    %898 = vmatprep.subr.mxu0 0.0
    %899 = vmatpush1.msra.mxu0 0.0
    %900 = vmatprep.subr.mxu0 0.0
    %901 = vmatpush1.msra.mxu0 0.0
    %902 = vmatprep.subr.mxu0 0.0
    %903 = vmatpush1.msra.mxu0 0.0
    %904 = vmatprep.subr.mxu0 0.0
    %905 = vmatpush1.msra.mxu0 0.0
    %906 = vmatprep.mubr.f32.mxu0 0.0
    %907 = vmatmul.mubr.f32.gmra.mrb[0].mxu0 %v840
    %v908 = vpop.f32.mrb[0].mxu0
    %v909 = vadd.f32 0.0, %v908
    %v910 = vpop.f32.mrb[0].mxu0
    %v911 = vadd.f32 0.0, %v910
    %912 = vdwg.mxu0
    %v913 = vadd.f32 %v837, %v909
    %v914 = vadd.f32 %v838, %v911
    %v915 = vxor.u32 %v913, 2147483648
    %v916 = vxor.u32 %v914, 2147483648
    %v917 = vmul.f32 %v915, 1.442695
    %v918 = vpow.pop %v917
    %v919 = vmul.f32 %v916, 1.442695
    %v920 = vpow.pop %v919
    %v921 = vadd.f32 %v918, 1.0
    %v922 = vadd.f32 %v920, 1.0
    %v923 = vrcp.pop %v921
    %v924 = vmul.f32 1.0, %v923
    %v925 = vrcp.pop %v922
    %v926 = vmul.f32 1.0, %v925
    %v927 = vtanh.pop %v914
    %929 = vrot.lane.b32.xlu0 %v806, 64
    %v930 = vpop.permute.xlu0 %929
    %v932 = vmul.f32 %v924, %v930
    %v933 = vmul.f32 %v924, %v927
    %935 = vrot.lane.b32.xlu0 %v933, 64
    %v936 = vpop.permute.xlu0 %935
    %v938 = vadd.f32 %v932, %v936
    %v939 = vtanh.pop %v938
    %v940 = vmul.f32 %v926, %v939
    %v941 = vld [vmem:[#allocation3 + $0x8] sm:$0x3]
    %vm942 = vcmp.gt.f32.partialorder %v941, 0.5
    %944 = vrot.lane.b32.xlu0 %v940, 64
    %v945 = vpop.permute.xlu0 %944
    %v947 = vsel %vm942, %v945, %v800
    %949 = vrot.lane.b32.xlu0 %v938, 64
    %v950 = vpop.permute.xlu0 %949
    %v952 = vsel %vm942, %v950, %v806
    %v953 = vmul.f32 %v947, %v941
    %v956 = vunpack.c.l.s4 1966171168
    %v957 = vunpack.c.0.s8 %v956
    %v958 = vlaneseq
    %v959 = vshrl.u32 %v958, 7
    %v960 = vsub.s32 %v957, %v959
    %v961 = vrot.slane %v953, %v960
    %v962 = vcombine.high %v961, %v961
    %v964 = vunpack.c.l.s4 1966171168
    %v965 = vunpack.c.0.s8 %v964
    %v966 = vlaneseq
    %v967 = vshrl.u32 %v966, 7
    %v968 = vsub.s32 %v965, %v967
    %v969 = vrot.slane %v961, %v968
    %v971 = vunpack.c.l.s4 1966171168
    %v972 = vunpack.c.0.s8 %v971
    %v973 = vlaneseq
    %v974 = vshrl.u32 %v973, 7
    %v975 = vsub.s32 %v972, %v974
    %v976 = vrot.slane %v962, %v975
    %979 = vst.msk [vmem:[#allocation4 + $0x4] sm:$0x1] %vm366, %v969
    %980 = vst.msk [vmem:[#allocation4 + $0xc] sm:$0x1] %vm366, %v976
    %981 = vst.msk [vmem:[#allocation4 + $0x3] sm:$0x1] %vm369, %v969
    %982 = vst.msk [vmem:[#allocation4 + $0xb] sm:$0x1] %vm369, %v976
    %v983 = vld [vmem:[#allocation2 + $0x10] sm:$0xc]
    %v984 = vld [vmem:[#allocation2 + $0x18] sm:$0xc]
    %v986 = vsel %vm209, %v947, 0
    %988 = vmatprep.subr.mxu0 %v213
    %989 = vmatpush1.msra.mxu0 %v212
    %990 = vmatprep.subr.mxu0 %v215
    %991 = vmatpush1.msra.mxu0 %v214
    %992 = vmatprep.subr.mxu0 %v217
    %993 = vmatpush1.msra.mxu0 %v216
    %994 = vmatprep.subr.mxu0 %v219
    %995 = vmatpush1.msra.mxu0 %v218
    %996 = vmatprep.subr.mxu0 %v221
    %997 = vmatpush1.msra.mxu0 %v220
    %998 = vmatprep.subr.mxu0 %v223
    %999 = vmatpush1.msra.mxu0 %v222
    %1000 = vmatprep.subr.mxu0 %v225
    %1001 = vmatpush1.msra.mxu0 %v224
    %1002 = vmatprep.subr.mxu0 %v227
    %1003 = vmatpush1.msra.mxu0 %v226
    %1004 = vmatprep.subr.mxu0 0.0
    %1005 = vmatpush1.msra.mxu0 0.0
    %1006 = vmatprep.subr.mxu0 0.0
    %1007 = vmatpush1.msra.mxu0 0.0
    %1008 = vmatprep.subr.mxu0 0.0
    %1009 = vmatpush1.msra.mxu0 0.0
    %1010 = vmatprep.subr.mxu0 0.0
    %1011 = vmatpush1.msra.mxu0 0.0
    %1012 = vmatprep.subr.mxu0 0.0
    %1013 = vmatpush1.msra.mxu0 0.0
    %1014 = vmatprep.subr.mxu0 0.0
    %1015 = vmatpush1.msra.mxu0 0.0
    %1016 = vmatprep.subr.mxu0 0.0
    %1017 = vmatpush1.msra.mxu0 0.0
    %1018 = vmatprep.subr.mxu0 0.0
    %1019 = vmatpush1.msra.mxu0 0.0
    %1020 = vmatprep.subr.mxu0 0.0
    %1021 = vmatpush1.msra.mxu0 0.0
    %1022 = vmatprep.subr.mxu0 0.0
    %1023 = vmatpush1.msra.mxu0 0.0
    %1024 = vmatprep.subr.mxu0 0.0
    %1025 = vmatpush1.msra.mxu0 0.0
    %1026 = vmatprep.subr.mxu0 0.0
    %1027 = vmatpush1.msra.mxu0 0.0
    %1028 = vmatprep.subr.mxu0 0.0
    %1029 = vmatpush1.msra.mxu0 0.0
    %1030 = vmatprep.subr.mxu0 0.0
    %1031 = vmatpush1.msra.mxu0 0.0
    %1032 = vmatprep.subr.mxu0 0.0
    %1033 = vmatpush1.msra.mxu0 0.0
    %1034 = vmatprep.subr.mxu0 0.0
    %1035 = vmatpush1.msra.mxu0 0.0
    %1036 = vmatprep.subr.mxu0 0.0
    %1037 = vmatpush1.msra.mxu0 0.0
    %1038 = vmatprep.subr.mxu0 0.0
    %1039 = vmatpush1.msra.mxu0 0.0
    %1040 = vmatprep.subr.mxu0 0.0
    %1041 = vmatpush1.msra.mxu0 0.0
    %1042 = vmatprep.subr.mxu0 0.0
    %1043 = vmatpush1.msra.mxu0 0.0
    %1044 = vmatprep.subr.mxu0 0.0
    %1045 = vmatpush1.msra.mxu0 0.0
    %1046 = vmatprep.subr.mxu0 0.0
    %1047 = vmatpush1.msra.mxu0 0.0
    %1048 = vmatprep.subr.mxu0 0.0
    %1049 = vmatpush1.msra.mxu0 0.0
    %1050 = vmatprep.subr.mxu0 0.0
    %1051 = vmatpush1.msra.mxu0 0.0
    %1052 = vmatprep.mubr.f32.mxu0 0.0
    %1053 = vmatmul.mubr.f32.gmra.mrb[0].mxu0 %v986
    %v1054 = vpop.f32.mrb[0].mxu0
    %v1055 = vadd.f32 0.0, %v1054
    %v1056 = vpop.f32.mrb[0].mxu0
    %v1057 = vadd.f32 0.0, %v1056
    %1058 = vdwg.mxu0
    %v1061 = vrot.slane %v1055, 6
    %v1062 = vrot.slane %v1057, 6
    %v1065 = vadd.f32 %v983, %v1061
    %v1066 = vadd.f32 %v984, %v1062
    %v1067 = vxor.u32 %v1065, 2147483648
    %v1068 = vxor.u32 %v1066, 2147483648
    %v1069 = vmul.f32 %v1067, 1.442695
    %v1070 = vpow.pop %v1069
    %v1071 = vmul.f32 %v1068, 1.442695
    %v1072 = vpow.pop %v1071
    %v1073 = vadd.f32 %v1070, 1.0
    %v1074 = vadd.f32 %v1072, 1.0
    %v1075 = vrcp.pop %v1073
    %v1076 = vmul.f32 1.0, %v1075
    %v1077 = vrcp.pop %v1074
    %v1078 = vmul.f32 1.0, %v1077
    %v1079 = vtanh.pop %v1066
    %v1081 = vrot.slane %v952, 6
    %1082 = vrot.lane.b32.xlu0 %v1081, 64
    %v1083 = vpop.permute.xlu0 %1082
    %v1085 = vmul.f32 %v1076, %v1083
    %v1086 = vmul.f32 %v1076, %v1079
    %1088 = vrot.lane.b32.xlu0 %v1086, 64
    %v1089 = vpop.permute.xlu0 %1088
    %v1091 = vadd.f32 %v1085, %v1089
    %v1092 = vtanh.pop %v1091
    %v1093 = vmul.f32 %v1078, %v1092
    %v1094 = vld [vmem:[#allocation3 + $0xa] sm:$0x3]
    %vm1095 = vcmp.gt.f32.partialorder %v1094, 0.5
    %v1097 = vrot.slane %v1093, 2
    %1098 = vrot.lane.b32.xlu0 %v1097, 64
    %v1099 = vpop.permute.xlu0 %1098
    %v1101 = vsel %vm1095, %v1099, %v947
    %v1103 = vrot.slane %v1091, 2
    %1104 = vrot.lane.b32.xlu0 %v1103, 64
    %v1105 = vpop.permute.xlu0 %1104
    %v1107 = vsel %vm1095, %v1105, %v952
    %v1108 = vmul.f32 %v1101, %v1094
    %v1111 = vunpack.c.l.s4 1966171168
    %v1112 = vunpack.c.0.s8 %v1111
    %v1113 = vlaneseq
    %v1114 = vshrl.u32 %v1113, 7
    %v1115 = vsub.s32 %v1112, %v1114
    %v1116 = vrot.slane %v1108, %v1115
    %v1117 = vcombine.high %v1116, %v1116
    %v1119 = vunpack.c.l.s4 1966171168
    %v1120 = vunpack.c.0.s8 %v1119
    %v1121 = vlaneseq
    %v1122 = vshrl.u32 %v1121, 7
    %v1123 = vsub.s32 %v1120, %v1122
    %v1124 = vrot.slane %v1116, %v1123
    %v1126 = vunpack.c.l.s4 1966171168
    %v1127 = vunpack.c.0.s8 %v1126
    %v1128 = vlaneseq
    %v1129 = vshrl.u32 %v1128, 7
    %v1130 = vsub.s32 %v1127, %v1129
    %v1131 = vrot.slane %v1117, %v1130
    %1134 = vst.msk [vmem:[#allocation4 + $0x5] sm:$0x1] %vm366, %v1124
    %1135 = vst.msk [vmem:[#allocation4 + $0xd] sm:$0x1] %vm366, %v1131
    %1136 = vst.msk [vmem:[#allocation4 + $0x2] sm:$0x1] %vm369, %v1124
    %1137 = vst.msk [vmem:[#allocation4 + $0xa] sm:$0x1] %vm369, %v1131
    %v1138 = vld [vmem:[#allocation2 + $0x10] sm:$0x30]
    %v1139 = vld [vmem:[#allocation2 + $0x18] sm:$0x30]
    %v1141 = vsel %vm209, %v1101, 0
    %1143 = vmatprep.subr.mxu0 %v213
    %1144 = vmatpush1.msra.mxu0 %v212
    %1145 = vmatprep.subr.mxu0 %v215
    %1146 = vmatpush1.msra.mxu0 %v214
    %1147 = vmatprep.subr.mxu0 %v217
    %1148 = vmatpush1.msra.mxu0 %v216
    %1149 = vmatprep.subr.mxu0 %v219
    %1150 = vmatpush1.msra.mxu0 %v218
    %1151 = vmatprep.subr.mxu0 %v221
    %1152 = vmatpush1.msra.mxu0 %v220
    %1153 = vmatprep.subr.mxu0 %v223
    %1154 = vmatpush1.msra.mxu0 %v222
    %1155 = vmatprep.subr.mxu0 %v225
    %1156 = vmatpush1.msra.mxu0 %v224
    %1157 = vmatprep.subr.mxu0 %v227
    %1158 = vmatpush1.msra.mxu0 %v226
    %1159 = vmatprep.subr.mxu0 0.0
    %1160 = vmatpush1.msra.mxu0 0.0
    %1161 = vmatprep.subr.mxu0 0.0
    %1162 = vmatpush1.msra.mxu0 0.0
    %1163 = vmatprep.subr.mxu0 0.0
    %1164 = vmatpush1.msra.mxu0 0.0
    %1165 = vmatprep.subr.mxu0 0.0
    %1166 = vmatpush1.msra.mxu0 0.0
    %1167 = vmatprep.subr.mxu0 0.0
    %1168 = vmatpush1.msra.mxu0 0.0
    %1169 = vmatprep.subr.mxu0 0.0
    %1170 = vmatpush1.msra.mxu0 0.0
    %1171 = vmatprep.subr.mxu0 0.0
    %1172 = vmatpush1.msra.mxu0 0.0
    %1173 = vmatprep.subr.mxu0 0.0
    %1174 = vmatpush1.msra.mxu0 0.0
    %1175 = vmatprep.subr.mxu0 0.0
    %1176 = vmatpush1.msra.mxu0 0.0
    %1177 = vmatprep.subr.mxu0 0.0
    %1178 = vmatpush1.msra.mxu0 0.0
    %1179 = vmatprep.subr.mxu0 0.0
    %1180 = vmatpush1.msra.mxu0 0.0
    %1181 = vmatprep.subr.mxu0 0.0
    %1182 = vmatpush1.msra.mxu0 0.0
    %1183 = vmatprep.subr.mxu0 0.0
    %1184 = vmatpush1.msra.mxu0 0.0
    %1185 = vmatprep.subr.mxu0 0.0
    %1186 = vmatpush1.msra.mxu0 0.0
    %1187 = vmatprep.subr.mxu0 0.0
    %1188 = vmatpush1.msra.mxu0 0.0
    %1189 = vmatprep.subr.mxu0 0.0
    %1190 = vmatpush1.msra.mxu0 0.0
    %1191 = vmatprep.subr.mxu0 0.0
    %1192 = vmatpush1.msra.mxu0 0.0
    %1193 = vmatprep.subr.mxu0 0.0
    %1194 = vmatpush1.msra.mxu0 0.0
    %1195 = vmatprep.subr.mxu0 0.0
    %1196 = vmatpush1.msra.mxu0 0.0
    %1197 = vmatprep.subr.mxu0 0.0
    %1198 = vmatpush1.msra.mxu0 0.0
    %1199 = vmatprep.subr.mxu0 0.0
    %1200 = vmatpush1.msra.mxu0 0.0
    %1201 = vmatprep.subr.mxu0 0.0
    %1202 = vmatpush1.msra.mxu0 0.0
    %1203 = vmatprep.subr.mxu0 0.0
    %1204 = vmatpush1.msra.mxu0 0.0
    %1205 = vmatprep.subr.mxu0 0.0
    %1206 = vmatpush1.msra.mxu0 0.0
    %1207 = vmatprep.mubr.f32.mxu0 0.0
    %1208 = vmatmul.mubr.f32.gmra.mrb[0].mxu0 %v1141
    %v1209 = vpop.f32.mrb[0].mxu0
    %v1210 = vadd.f32 0.0, %v1209
    %v1211 = vpop.f32.mrb[0].mxu0
    %v1212 = vadd.f32 0.0, %v1211
    %1213 = vdwg.mxu0
    %v1216 = vrot.slane %v1210, 4
    %v1217 = vrot.slane %v1212, 4
    %v1220 = vadd.f32 %v1138, %v1216
    %v1221 = vadd.f32 %v1139, %v1217
    %v1222 = vxor.u32 %v1220, 2147483648
    %v1223 = vxor.u32 %v1221, 2147483648
    %v1224 = vmul.f32 %v1222, 1.442695
    %v1225 = vpow.pop %v1224
    %v1226 = vmul.f32 %v1223, 1.442695
    %v1227 = vpow.pop %v1226
    %v1228 = vadd.f32 %v1225, 1.0
    %v1229 = vadd.f32 %v1227, 1.0
    %v1230 = vrcp.pop %v1228
    %v1231 = vmul.f32 1.0, %v1230
    %v1232 = vrcp.pop %v1229
    %v1233 = vmul.f32 1.0, %v1232
    %v1234 = vtanh.pop %v1221
    %v1236 = vrot.slane %v1107, 4
    %1237 = vrot.lane.b32.xlu0 %v1236, 64
    %v1238 = vpop.permute.xlu0 %1237
    %v1240 = vmul.f32 %v1231, %v1238
    %v1241 = vmul.f32 %v1231, %v1234
    %1243 = vrot.lane.b32.xlu0 %v1241, 64
    %v1244 = vpop.permute.xlu0 %1243
    %v1246 = vadd.f32 %v1240, %v1244
    %v1247 = vtanh.pop %v1246
    %v1248 = vmul.f32 %v1233, %v1247
    %v1249 = vld [vmem:[#allocation3 + $0xc] sm:$0x3]
    %vm1250 = vcmp.gt.f32.partialorder %v1249, 0.5
    %v1252 = vrot.slane %v1248, 4
    %1253 = vrot.lane.b32.xlu0 %v1252, 64
    %v1254 = vpop.permute.xlu0 %1253
    %v1256 = vsel %vm1250, %v1254, %v1101
    %v1258 = vrot.slane %v1246, 4
    %1259 = vrot.lane.b32.xlu0 %v1258, 64
    %v1260 = vpop.permute.xlu0 %1259
    %v1262 = vsel %vm1250, %v1260, %v1107
    %v1263 = vmul.f32 %v1256, %v1249
    %v1266 = vunpack.c.l.s4 1966171168
    %v1267 = vunpack.c.0.s8 %v1266
    %v1268 = vlaneseq
    %v1269 = vshrl.u32 %v1268, 7
    %v1270 = vsub.s32 %v1267, %v1269
    %v1271 = vrot.slane %v1263, %v1270
    %v1272 = vcombine.high %v1271, %v1271
    %v1274 = vunpack.c.l.s4 1966171168
    %v1275 = vunpack.c.0.s8 %v1274
    %v1276 = vlaneseq
    %v1277 = vshrl.u32 %v1276, 7
    %v1278 = vsub.s32 %v1275, %v1277
    %v1279 = vrot.slane %v1271, %v1278
    %v1281 = vunpack.c.l.s4 1966171168
    %v1282 = vunpack.c.0.s8 %v1281
    %v1283 = vlaneseq
    %v1284 = vshrl.u32 %v1283, 7
    %v1285 = vsub.s32 %v1282, %v1284
    %v1286 = vrot.slane %v1272, %v1285
    %1289 = vst.msk [vmem:[#allocation4 + $0x6] sm:$0x1] %vm366, %v1279
    %1290 = vst.msk [vmem:[#allocation4 + $0xe] sm:$0x1] %vm366, %v1286
    %1291 = vst.msk [vmem:[#allocation4 + $0x1] sm:$0x1] %vm369, %v1279
    %1292 = vst.msk [vmem:[#allocation4 + $0x9] sm:$0x1] %vm369, %v1286
    %v1293 = vld [vmem:[#allocation2 + $0x10] sm:$0xc0]
    %v1294 = vld [vmem:[#allocation2 + $0x18] sm:$0xc0]
    %v1296 = vsel %vm209, %v1256, 0
    %1298 = vmatprep.subr.mxu0 %v213
    %1299 = vmatpush1.msra.mxu0 %v212
    %1300 = vmatprep.subr.mxu0 %v215
    %1301 = vmatpush1.msra.mxu0 %v214
    %1302 = vmatprep.subr.mxu0 %v217
    %1303 = vmatpush1.msra.mxu0 %v216
    %1304 = vmatprep.subr.mxu0 %v219
    %1305 = vmatpush1.msra.mxu0 %v218
    %1306 = vmatprep.subr.mxu0 %v221
    %1307 = vmatpush1.msra.mxu0 %v220
    %1308 = vmatprep.subr.mxu0 %v223
    %1309 = vmatpush1.msra.mxu0 %v222
    %1310 = vmatprep.subr.mxu0 %v225
    %1311 = vmatpush1.msra.mxu0 %v224
    %1312 = vmatprep.subr.mxu0 %v227
    %1313 = vmatpush1.msra.mxu0 %v226
    %1314 = vmatprep.subr.mxu0 0.0
    %1315 = vmatpush1.msra.mxu0 0.0
    %1316 = vmatprep.subr.mxu0 0.0
    %1317 = vmatpush1.msra.mxu0 0.0
    %1318 = vmatprep.subr.mxu0 0.0
    %1319 = vmatpush1.msra.mxu0 0.0
    %1320 = vmatprep.subr.mxu0 0.0
    %1321 = vmatpush1.msra.mxu0 0.0
    %1322 = vmatprep.subr.mxu0 0.0
    %1323 = vmatpush1.msra.mxu0 0.0
    %1324 = vmatprep.subr.mxu0 0.0
    %1325 = vmatpush1.msra.mxu0 0.0
    %1326 = vmatprep.subr.mxu0 0.0
    %1327 = vmatpush1.msra.mxu0 0.0
    %1328 = vmatprep.subr.mxu0 0.0
    %1329 = vmatpush1.msra.mxu0 0.0
    %1330 = vmatprep.subr.mxu0 0.0
    %1331 = vmatpush1.msra.mxu0 0.0
    %1332 = vmatprep.subr.mxu0 0.0
    %1333 = vmatpush1.msra.mxu0 0.0
    %1334 = vmatprep.subr.mxu0 0.0
    %1335 = vmatpush1.msra.mxu0 0.0
    %1336 = vmatprep.subr.mxu0 0.0
    %1337 = vmatpush1.msra.mxu0 0.0
    %1338 = vmatprep.subr.mxu0 0.0
    %1339 = vmatpush1.msra.mxu0 0.0
    %1340 = vmatprep.subr.mxu0 0.0
    %1341 = vmatpush1.msra.mxu0 0.0
    %1342 = vmatprep.subr.mxu0 0.0
    %1343 = vmatpush1.msra.mxu0 0.0
    %1344 = vmatprep.subr.mxu0 0.0
    %1345 = vmatpush1.msra.mxu0 0.0
    %1346 = vmatprep.subr.mxu0 0.0
    %1347 = vmatpush1.msra.mxu0 0.0
    %1348 = vmatprep.subr.mxu0 0.0
    %1349 = vmatpush1.msra.mxu0 0.0
    %1350 = vmatprep.subr.mxu0 0.0
    %1351 = vmatpush1.msra.mxu0 0.0
    %1352 = vmatprep.subr.mxu0 0.0
    %1353 = vmatpush1.msra.mxu0 0.0
    %1354 = vmatprep.subr.mxu0 0.0
    %1355 = vmatpush1.msra.mxu0 0.0
    %1356 = vmatprep.subr.mxu0 0.0
    %1357 = vmatpush1.msra.mxu0 0.0
    %1358 = vmatprep.subr.mxu0 0.0
    %1359 = vmatpush1.msra.mxu0 0.0
    %1360 = vmatprep.subr.mxu0 0.0
    %1361 = vmatpush1.msra.mxu0 0.0
    %1362 = vmatprep.mubr.f32.mxu0 0.0
    %1363 = vmatmul.mubr.f32.gmra.mrb[0].mxu0 %v1296
    %v1364 = vpop.f32.mrb[0].mxu0
    %v1365 = vadd.f32 0.0, %v1364
    %v1366 = vpop.f32.mrb[0].mxu0
    %v1367 = vadd.f32 0.0, %v1366
    %1368 = vdwg.mxu0
    %v1371 = vrot.slane %v1365, 2
    %v1372 = vrot.slane %v1367, 2
    %v1375 = vadd.f32 %v1293, %v1371
    %v1376 = vadd.f32 %v1294, %v1372
    %v1377 = vxor.u32 %v1375, 2147483648
    %v1378 = vxor.u32 %v1376, 2147483648
    %v1379 = vmul.f32 %v1377, 1.442695
    %v1380 = vpow.pop %v1379
    %v1381 = vmul.f32 %v1378, 1.442695
    %v1382 = vpow.pop %v1381
    %v1383 = vadd.f32 %v1380, 1.0
    %v1384 = vadd.f32 %v1382, 1.0
    %v1385 = vrcp.pop %v1383
    %v1386 = vmul.f32 1.0, %v1385
    %v1387 = vrcp.pop %v1384
    %v1388 = vmul.f32 1.0, %v1387
    %v1389 = vtanh.pop %v1376
    %v1391 = vrot.slane %v1262, 2
    %1392 = vrot.lane.b32.xlu0 %v1391, 64
    %v1393 = vpop.permute.xlu0 %1392
    %v1395 = vmul.f32 %v1386, %v1393
    %v1396 = vmul.f32 %v1386, %v1389
    %1398 = vrot.lane.b32.xlu0 %v1396, 64
    %v1399 = vpop.permute.xlu0 %1398
    %v1401 = vadd.f32 %v1395, %v1399
    %v1402 = vtanh.pop %v1401
    %v1403 = vmul.f32 %v1388, %v1402
    %v1404 = vld [vmem:[#allocation3 + $0xe] sm:$0x3]
    %vm1405 = vcmp.gt.f32.partialorder %v1404, 0.5
    %v1407 = vrot.slane %v1403, 6
    %1408 = vrot.lane.b32.xlu0 %v1407, 64
    %v1409 = vpop.permute.xlu0 %1408
    %v1411 = vsel %vm1405, %v1409, %v1256
    %v1412 = vmul.f32 %v1411, %v1404
    %v1415 = vunpack.c.l.s4 1966171168
    %v1416 = vunpack.c.0.s8 %v1415
    %v1417 = vlaneseq
    %v1418 = vshrl.u32 %v1417, 7
    %v1419 = vsub.s32 %v1416, %v1418
    %v1420 = vrot.slane %v1412, %v1419
    %v1421 = vcombine.high %v1420, %v1420
    %v1423 = vunpack.c.l.s4 1966171168
    %v1424 = vunpack.c.0.s8 %v1423
    %v1425 = vlaneseq
    %v1426 = vshrl.u32 %v1425, 7
    %v1427 = vsub.s32 %v1424, %v1426
    %v1428 = vrot.slane %v1420, %v1427
    %v1430 = vunpack.c.l.s4 1966171168
    %v1431 = vunpack.c.0.s8 %v1430
    %v1432 = vlaneseq
    %v1433 = vshrl.u32 %v1432, 7
    %v1434 = vsub.s32 %v1431, %v1433
    %v1435 = vrot.slane %v1421, %v1434
    %1438 = vst.msk [vmem:[#allocation4 + $0x7] sm:$0x1] %vm366, %v1428
    %1439 = vst.msk [vmem:[#allocation4 + $0xf] sm:$0x1] %vm366, %v1435
    %1440 = vst.msk [vmem:[#allocation4] sm:$0x1] %vm369, %v1428
    %1441 = vst.msk [vmem:[#allocation4 + $0x8] sm:$0x1] %vm369, %v1435
    %v1442 = vld [vmem:[#allocation4] sm:$0xff]
    %v1443 = vld [vmem:[#allocation4 + $0x8] sm:$0xff]
    %v1444 = vld [vmem:[#allocation5 + $0x190] sm:$0xff]
    %v1445 = vld [vmem:[#allocation5 + $0x1a0] sm:$0xff]
    %v1446 = vld [vmem:[#allocation5 + $0x1b0] sm:$0xff]
    %v1447 = vld [vmem:[#allocation5 + $0x1c0] sm:$0xff]
    %v1448 = vld [vmem:[#allocation5 + $0x1d0] sm:$0xff]
    %v1449 = vld [vmem:[#allocation5 + $0x1e0] sm:$0xff]
    %v1450 = vld [vmem:[#allocation5 + $0x1f0] sm:$0xff]
    %v1451 = vld [vmem:[#allocation5 + $0x200] sm:$0xff]
    %v1453 = vsel %vm209, %v1442, 0
    %v1456 = vsel %vm209, %v1443, 0
    %1458 = vmatprep.subr.mxu0 0.0
    %1459 = vmatpush1.msra.mxu0 %v1444
    %1460 = vmatprep.subr.mxu0 0.0
    %1461 = vmatpush1.msra.mxu0 %v1445
    %1462 = vmatprep.subr.mxu0 0.0
    %1463 = vmatpush1.msra.mxu0 %v1446
    %1464 = vmatprep.subr.mxu0 0.0
    %1465 = vmatpush1.msra.mxu0 %v1447
    %1466 = vmatprep.subr.mxu0 0.0
    %1467 = vmatpush1.msra.mxu0 %v1448
    %1468 = vmatprep.subr.mxu0 0.0
    %1469 = vmatpush1.msra.mxu0 %v1449
    %1470 = vmatprep.subr.mxu0 0.0
    %1471 = vmatpush1.msra.mxu0 %v1450
    %1472 = vmatprep.subr.mxu0 0.0
    %1473 = vmatpush1.msra.mxu0 %v1451
    %1474 = vmatprep.subr.mxu0 0.0
    %1475 = vmatpush1.msra.mxu0 0.0
    %1476 = vmatprep.subr.mxu0 0.0
    %1477 = vmatpush1.msra.mxu0 0.0
    %1478 = vmatprep.subr.mxu0 0.0
    %1479 = vmatpush1.msra.mxu0 0.0
    %1480 = vmatprep.subr.mxu0 0.0
    %1481 = vmatpush1.msra.mxu0 0.0
    %1482 = vmatprep.subr.mxu0 0.0
    %1483 = vmatpush1.msra.mxu0 0.0
    %1484 = vmatprep.subr.mxu0 0.0
    %1485 = vmatpush1.msra.mxu0 0.0
    %1486 = vmatprep.subr.mxu0 0.0
    %1487 = vmatpush1.msra.mxu0 0.0
    %1488 = vmatprep.subr.mxu0 0.0
    %1489 = vmatpush1.msra.mxu0 0.0
    %1490 = vmatprep.subr.mxu0 0.0
    %1491 = vmatpush1.msra.mxu0 0.0
    %1492 = vmatprep.subr.mxu0 0.0
    %1493 = vmatpush1.msra.mxu0 0.0
    %1494 = vmatprep.subr.mxu0 0.0
    %1495 = vmatpush1.msra.mxu0 0.0
    %1496 = vmatprep.subr.mxu0 0.0
    %1497 = vmatpush1.msra.mxu0 0.0
    %1498 = vmatprep.subr.mxu0 0.0
    %1499 = vmatpush1.msra.mxu0 0.0
    %1500 = vmatprep.subr.mxu0 0.0
    %1501 = vmatpush1.msra.mxu0 0.0
    %1502 = vmatprep.subr.mxu0 0.0
    %1503 = vmatpush1.msra.mxu0 0.0
    %1504 = vmatprep.subr.mxu0 0.0
    %1505 = vmatpush1.msra.mxu0 0.0
    %1506 = vmatprep.subr.mxu0 0.0
    %1507 = vmatpush1.msra.mxu0 0.0
    %1508 = vmatprep.subr.mxu0 0.0
    %1509 = vmatpush1.msra.mxu0 0.0
    %1510 = vmatprep.subr.mxu0 0.0
    %1511 = vmatpush1.msra.mxu0 0.0
    %1512 = vmatprep.subr.mxu0 0.0
    %1513 = vmatpush1.msra.mxu0 0.0
    %1514 = vmatprep.subr.mxu0 0.0
    %1515 = vmatpush1.msra.mxu0 0.0
    %1516 = vmatprep.subr.mxu0 0.0
    %1517 = vmatpush1.msra.mxu0 0.0
    %1518 = vmatprep.subr.mxu0 0.0
    %1519 = vmatpush1.msra.mxu0 0.0
    %1520 = vmatprep.subr.mxu0 0.0
    %1521 = vmatpush1.msra.mxu0 0.0
    %1522 = vmatprep.mubr.f32.mxu0 0.0
    %1523 = vmatmul.mubr.f32.gmra.mrb[0].mxu0 %v1453
    %v1524 = vpop.f32.mrb[0].mxu0
    %v1525 = vadd.f32 0.0, %v1524
    %v1526 = vpop.f32.mrb[0].mxu0
    %1527 = vmatprep.mubr.f32.mxu0 0.0
    %1528 = vmatmul.mubr.f32.gmra.mrb[0].mxu0 %v1456
    %v1529 = vpop.f32.mrb[0].mxu0
    %v1530 = vadd.f32 0.0, %v1529
    %v1531 = vpop.f32.mrb[0].mxu0
    %1532 = vdwg.mxu0
    %1533 = vxpose.xlu0.b32.start [1/16] %v1525, 128
    %1534 = vxpose.xlu0.b32.cont [2/16] 0.0, 128
    %1535 = vxpose.xlu0.b32.cont [3/16] 0.0, 128
    %1536 = vxpose.xlu0.b32.cont [4/16] 0.0, 128
    %1537 = vxpose.xlu0.b32.cont [5/16] 0.0, 128
    %1538 = vxpose.xlu0.b32.cont [6/16] 0.0, 128
    %1539 = vxpose.xlu0.b32.cont [7/16] 0.0, 128
    %1540 = vxpose.xlu0.b32.cont [8/16] 0.0, 128
    %1541 = vxpose.xlu0.b32.cont [9/16] 0.0, 128
    %1542 = vxpose.xlu0.b32.cont [10/16] 0.0, 128
    %1543 = vxpose.xlu0.b32.cont [11/16] 0.0, 128
    %1544 = vxpose.xlu0.b32.cont [12/16] 0.0, 128
    %1545 = vxpose.xlu0.b32.cont [13/16] 0.0, 128
    %1546 = vxpose.xlu0.b32.cont [14/16] 0.0, 128
    %1547 = vxpose.xlu0.b32.cont [15/16] 0.0, 128
    %1548 = vxpose.xlu0.b32.end [16/16] 0.0, 128
    %v1549 = vpop.trf.xlu0
    %v1550 = vpop.trf.xlu0
    %v1551 = vpop.trf.xlu0
    %v1552 = vpop.trf.xlu0
    %v1553 = vpop.trf.xlu0
    %v1554 = vpop.trf.xlu0
    %v1555 = vpop.trf.xlu0
    %v1556 = vpop.trf.xlu0
    %v1557 = vpop.trf.xlu0
    %v1558 = vpop.trf.xlu0
    %v1559 = vpop.trf.xlu0
    %v1560 = vpop.trf.xlu0
    %v1561 = vpop.trf.xlu0
    %v1562 = vpop.trf.xlu0
    %v1563 = vpop.trf.xlu0
    %v1564 = vpop.trf.xlu0
    %1565 = vxpose.xlu0.b32.start [1/16] %v1530, 128
    %1566 = vxpose.xlu0.b32.cont [2/16] 0.0, 128
    %1567 = vxpose.xlu0.b32.cont [3/16] 0.0, 128
    %1568 = vxpose.xlu0.b32.cont [4/16] 0.0, 128
    %1569 = vxpose.xlu0.b32.cont [5/16] 0.0, 128
    %1570 = vxpose.xlu0.b32.cont [6/16] 0.0, 128
    %1571 = vxpose.xlu0.b32.cont [7/16] 0.0, 128
    %1572 = vxpose.xlu0.b32.cont [8/16] 0.0, 128
    %1573 = vxpose.xlu0.b32.cont [9/16] 0.0, 128
    %1574 = vxpose.xlu0.b32.cont [10/16] 0.0, 128
    %1575 = vxpose.xlu0.b32.cont [11/16] 0.0, 128
    %1576 = vxpose.xlu0.b32.cont [12/16] 0.0, 128
    %1577 = vxpose.xlu0.b32.cont [13/16] 0.0, 128
    %1578 = vxpose.xlu0.b32.cont [14/16] 0.0, 128
    %1579 = vxpose.xlu0.b32.cont [15/16] 0.0, 128
    %1580 = vxpose.xlu0.b32.end [16/16] 0.0, 128
    %v1581 = vpop.trf.xlu0
    %v1582 = vpop.trf.xlu0
    %v1583 = vpop.trf.xlu0
    %v1584 = vpop.trf.xlu0
    %v1585 = vpop.trf.xlu0
    %v1586 = vpop.trf.xlu0
    %v1587 = vpop.trf.xlu0
    %v1588 = vpop.trf.xlu0
    %v1589 = vpop.trf.xlu0
    %v1590 = vpop.trf.xlu0
    %v1591 = vpop.trf.xlu0
    %v1592 = vpop.trf.xlu0
    %v1593 = vpop.trf.xlu0
    %v1594 = vpop.trf.xlu0
    %v1595 = vpop.trf.xlu0
    %v1596 = vpop.trf.xlu0
    %v1597 = vld [vmem:[%s2] sm:$0x1]
    %v1598 = vld [vmem:[%s2 + $0x1] sm:$0x1]
    %v1601 = vlaneseq
    %v1602 = vshrl.u32 %v1601, 7
    %v1603 = vsub.s32 0, %v1602
    %v1604 = vrot.slane %v1597, %v1603
    %v1605 = vlaneseq
    %v1606 = vshrl.u32 %v1605, 7
    %v1607 = vsub.s32 0, %v1606
    %v1608 = vrot.slane %v1598, %v1607
    %v1611 = vadd.f32 %v1549, %v1604
    %v1612 = vadd.f32 %v1550, %v1604
    %v1613 = vadd.f32 %v1581, %v1608
    %v1614 = vadd.f32 %v1582, %v1608
    %vm1615 = vcmask 64512
    %v1616 = vsel %vm1615, %v1611, -inf
    %1617 = vmax.xlane.f32.xlu0 %v1616
    %v1618 = vpop.xlane.xlu0 %1617
    %v1619 = vsel %vm1615, %v1612, -inf
    %1620 = vmax.xlane.f32.xlu0 %v1619
    %v1621 = vpop.xlane.xlu0 %1620
    %v1622 = vsel %vm1615, %v1613, -inf
    %1623 = vmax.xlane.f32.xlu0 %v1622
    %v1624 = vpop.xlane.xlu0 %1623
    %v1625 = vsel %vm1615, %v1614, -inf
    %1626 = vmax.xlane.f32.xlu0 %v1625
    %v1627 = vpop.xlane.xlu0 %1626
    %v1628 = vsub.f32 %v1611, %v1618
    %v1629 = vsub.f32 %v1612, %v1621
    %v1630 = vsub.f32 %v1613, %v1624
    %v1631 = vsub.f32 %v1614, %v1627
    %v1632 = vmul.f32 %v1628, 1.442695
    %v1633 = vpow.pop %v1632
    %v1634 = vmul.f32 %v1629, 1.442695
    %v1635 = vpow.pop %v1634
    %v1636 = vmul.f32 %v1630, 1.442695
    %v1637 = vpow.pop %v1636
    %v1638 = vmul.f32 %v1631, 1.442695
    %v1639 = vpow.pop %v1638
    %v1640 = vsel %vm1615, %v1633, 0.0
    %1641 = vadd.xlane.f32.xlu0 %v1640
    %v1642 = vpop.xlane.xlu0 %1641
    %v1643 = vsel %vm1615, %v1635, 0.0
    %1644 = vadd.xlane.f32.xlu0 %v1643
    %v1645 = vpop.xlane.xlu0 %1644
    %v1646 = vsel %vm1615, %v1637, 0.0
    %1647 = vadd.xlane.f32.xlu0 %v1646
    %v1648 = vpop.xlane.xlu0 %1647
    %v1649 = vsel %vm1615, %v1639, 0.0
    %1650 = vadd.xlane.f32.xlu0 %v1649
    %v1651 = vpop.xlane.xlu0 %1650
    %v1652 = vrcp.pop %v1642
    %v1653 = vrcp.pop %v1645
    %v1654 = vrcp.pop %v1648
    %v1655 = vrcp.pop %v1651
    %v1656 = vmul.f32 %v1633, %v1652
    %v1657 = vmul.f32 %v1635, %v1653
    %v1658 = vmul.f32 %v1637, %v1654
    %v1659 = vmul.f32 %v1639, %v1655
    %v1661 = vsel %vm1615, %v1656, 0
    %v1664 = vsel %vm1615, %v1657, 0
    %1666 = vmatprep.subr.mxu0 0.0
    %1667 = vmatpush1.msra.mxu0 %v1442
    %1668 = vmatprep.subr.mxu0 0.0
    %1669 = vmatpush1.msra.mxu0 0.0
    %1670 = vmatprep.subr.mxu0 0.0
    %1671 = vmatpush1.msra.mxu0 0.0
    %1672 = vmatprep.subr.mxu0 0.0
    %1673 = vmatpush1.msra.mxu0 0.0
    %1674 = vmatprep.subr.mxu0 0.0
    %1675 = vmatpush1.msra.mxu0 0.0
    %1676 = vmatprep.subr.mxu0 0.0
    %1677 = vmatpush1.msra.mxu0 0.0
    %1678 = vmatprep.subr.mxu0 0.0
    %1679 = vmatpush1.msra.mxu0 0.0
    %1680 = vmatprep.subr.mxu0 0.0
    %1681 = vmatpush1.msra.mxu0 0.0
    %1682 = vmatprep.subr.mxu0 0.0
    %1683 = vmatpush1.msra.mxu0 0.0
    %1684 = vmatprep.subr.mxu0 0.0
    %1685 = vmatpush1.msra.mxu0 0.0
    %1686 = vmatprep.subr.mxu0 0.0
    %1687 = vmatpush1.msra.mxu0 0.0
    %1688 = vmatprep.subr.mxu0 0.0
    %1689 = vmatpush1.msra.mxu0 0.0
    %1690 = vmatprep.subr.mxu0 0.0
    %1691 = vmatpush1.msra.mxu0 0.0
    %1692 = vmatprep.subr.mxu0 0.0
    %1693 = vmatpush1.msra.mxu0 0.0
    %1694 = vmatprep.subr.mxu0 0.0
    %1695 = vmatpush1.msra.mxu0 0.0
    %1696 = vmatprep.subr.mxu0 0.0
    %1697 = vmatpush1.msra.mxu0 0.0
    %1698 = vmatprep.subr.mxu0 0.0
    %1699 = vmatpush1.msra.mxu0 0.0
    %1700 = vmatprep.subr.mxu0 0.0
    %1701 = vmatpush1.msra.mxu0 0.0
    %1702 = vmatprep.subr.mxu0 0.0
    %1703 = vmatpush1.msra.mxu0 0.0
    %1704 = vmatprep.subr.mxu0 0.0
    %1705 = vmatpush1.msra.mxu0 0.0
    %1706 = vmatprep.subr.mxu0 0.0
    %1707 = vmatpush1.msra.mxu0 0.0
    %1708 = vmatprep.subr.mxu0 0.0
    %1709 = vmatpush1.msra.mxu0 0.0
    %1710 = vmatprep.subr.mxu0 0.0
    %1711 = vmatpush1.msra.mxu0 0.0
    %1712 = vmatprep.subr.mxu0 0.0
    %1713 = vmatpush1.msra.mxu0 0.0
    %1714 = vmatprep.subr.mxu0 0.0
    %1715 = vmatpush1.msra.mxu0 0.0
    %1716 = vmatprep.subr.mxu0 0.0
    %1717 = vmatpush1.msra.mxu0 0.0
    %1718 = vmatprep.subr.mxu0 0.0
    %1719 = vmatpush1.msra.mxu0 0.0
    %1720 = vmatprep.subr.mxu0 0.0
    %1721 = vmatpush1.msra.mxu0 0.0
    %1722 = vmatprep.subr.mxu0 0.0
    %1723 = vmatpush1.msra.mxu0 0.0
    %1724 = vmatprep.subr.mxu0 0.0
    %1725 = vmatpush1.msra.mxu0 0.0
    %1726 = vmatprep.subr.mxu0 0.0
    %1727 = vmatpush1.msra.mxu0 0.0
    %1728 = vmatprep.subr.mxu0 0.0
    %1729 = vmatpush1.msra.mxu0 0.0
    %1730 = vmatprep.mubr.f32.mxu0 0.0
    %1731 = vmatmul.mubr.f32.gmra.mrb[0].mxu0 %v1661
    %v1732 = vpop.f32.mrb[0].mxu0
    %v1733 = vadd.f32 0.0, %v1732
    %v1734 = vpop.f32.mrb[0].mxu0
    %1735 = vmatprep.mubr.f32.mxu0 0.0
    %1736 = vmatmul.mubr.f32.gmra.mrb[0].mxu0 %v1664
    %v1737 = vpop.f32.mrb[0].mxu0
    %v1738 = vadd.f32 0.0, %v1737
    %v1739 = vpop.f32.mrb[0].mxu0
    %1740 = vdwg.mxu0
    %v1742 = vsel %vm1615, %v1658, 0
    %v1745 = vsel %vm1615, %v1659, 0
    %1747 = vmatprep.subr.mxu0 0.0
    %1748 = vmatpush1.msra.mxu0 %v1443
    %1749 = vmatprep.subr.mxu0 0.0
    %1750 = vmatpush1.msra.mxu0 0.0
    %1751 = vmatprep.subr.mxu0 0.0
    %1752 = vmatpush1.msra.mxu0 0.0
    %1753 = vmatprep.subr.mxu0 0.0
    %1754 = vmatpush1.msra.mxu0 0.0
    %1755 = vmatprep.subr.mxu0 0.0
    %1756 = vmatpush1.msra.mxu0 0.0
    %1757 = vmatprep.subr.mxu0 0.0
    %1758 = vmatpush1.msra.mxu0 0.0
    %1759 = vmatprep.subr.mxu0 0.0
    %1760 = vmatpush1.msra.mxu0 0.0
    %1761 = vmatprep.subr.mxu0 0.0
    %1762 = vmatpush1.msra.mxu0 0.0
    %1763 = vmatprep.subr.mxu0 0.0
    %1764 = vmatpush1.msra.mxu0 0.0
    %1765 = vmatprep.subr.mxu0 0.0
    %1766 = vmatpush1.msra.mxu0 0.0
    %1767 = vmatprep.subr.mxu0 0.0
    %1768 = vmatpush1.msra.mxu0 0.0
    %1769 = vmatprep.subr.mxu0 0.0
    %1770 = vmatpush1.msra.mxu0 0.0
    %1771 = vmatprep.subr.mxu0 0.0
    %1772 = vmatpush1.msra.mxu0 0.0
    %1773 = vmatprep.subr.mxu0 0.0
    %1774 = vmatpush1.msra.mxu0 0.0
    %1775 = vmatprep.subr.mxu0 0.0
    %1776 = vmatpush1.msra.mxu0 0.0
    %1777 = vmatprep.subr.mxu0 0.0
    %1778 = vmatpush1.msra.mxu0 0.0
    %1779 = vmatprep.subr.mxu0 0.0
    %1780 = vmatpush1.msra.mxu0 0.0
    %1781 = vmatprep.subr.mxu0 0.0
    %1782 = vmatpush1.msra.mxu0 0.0
    %1783 = vmatprep.subr.mxu0 0.0
    %1784 = vmatpush1.msra.mxu0 0.0
    %1785 = vmatprep.subr.mxu0 0.0
    %1786 = vmatpush1.msra.mxu0 0.0
    %1787 = vmatprep.subr.mxu0 0.0
    %1788 = vmatpush1.msra.mxu0 0.0
    %1789 = vmatprep.subr.mxu0 0.0
    %1790 = vmatpush1.msra.mxu0 0.0
    %1791 = vmatprep.subr.mxu0 0.0
    %1792 = vmatpush1.msra.mxu0 0.0
    %1793 = vmatprep.subr.mxu0 0.0
    %1794 = vmatpush1.msra.mxu0 0.0
    %1795 = vmatprep.subr.mxu0 0.0
    %1796 = vmatpush1.msra.mxu0 0.0
    %1797 = vmatprep.subr.mxu0 0.0
    %1798 = vmatpush1.msra.mxu0 0.0
    %1799 = vmatprep.subr.mxu0 0.0
    %1800 = vmatpush1.msra.mxu0 0.0
    %1801 = vmatprep.subr.mxu0 0.0
    %1802 = vmatpush1.msra.mxu0 0.0
    %1803 = vmatprep.subr.mxu0 0.0
    %1804 = vmatpush1.msra.mxu0 0.0
    %1805 = vmatprep.subr.mxu0 0.0
    %1806 = vmatpush1.msra.mxu0 0.0
    %1807 = vmatprep.subr.mxu0 0.0
    %1808 = vmatpush1.msra.mxu0 0.0
    %1809 = vmatprep.subr.mxu0 0.0
    %1810 = vmatpush1.msra.mxu0 0.0
    %1811 = vmatprep.mubr.f32.mxu0 0.0
    %1812 = vmatmul.mubr.f32.gmra.mrb[0].mxu0 %v1742
    %v1813 = vpop.f32.mrb[0].mxu0
    %v1814 = vadd.f32 0.0, %v1813
    %v1815 = vpop.f32.mrb[0].mxu0
    %1816 = vmatprep.mubr.f32.mxu0 0.0
    %1817 = vmatmul.mubr.f32.gmra.mrb[0].mxu0 %v1745
    %v1818 = vpop.f32.mrb[0].mxu0
    %v1819 = vadd.f32 0.0, %v1818
    %v1820 = vpop.f32.mrb[0].mxu0
    %1821 = vdwg.mxu0
    %v1822 = vld [vmem:[#allocation5 + $0x210] sm:$0xff]
    %v1823 = vld [vmem:[#allocation5 + $0x220] sm:$0xff]
    %v1824 = vld [vmem:[#allocation5 + $0x230] sm:$0xff]
    %v1825 = vld [vmem:[#allocation5 + $0x240] sm:$0xff]
    %v1826 = vld [vmem:[#allocation5 + $0x250] sm:$0xff]
    %v1827 = vld [vmem:[#allocation5 + $0x260] sm:$0xff]
    %v1828 = vld [vmem:[#allocation5 + $0x270] sm:$0xff]
    %v1829 = vld [vmem:[#allocation5 + $0x280] sm:$0xff]
    %v1830 = vld [vmem:[#allocation5 + $0x290] ss:$0 sm:$0xff]
    %v1831 = vld [vmem:[#allocation5 + $0x2a0] ss:$0 sm:$0xff]
    %v1832 = vld [vmem:[#allocation5 + $0x2b0] ss:$0 sm:$0xff]
    %v1834 = vsel %vm209, %v1733, 0
    %v1837 = vsel %vm209, %v1738, 0
    %v1840 = vsel %vm209, %v1814, 0
    %v1843 = vsel %vm209, %v1819, 0
    %1845 = vmatprep.subr.mxu0 0.0
    %1846 = vmatpush1.msra.mxu0 %v1822
    %1847 = vmatprep.subr.mxu0 0.0
    %1848 = vmatpush1.msra.mxu0 %v1823
    %1849 = vmatprep.subr.mxu0 0.0
    %1850 = vmatpush1.msra.mxu0 %v1824
    %1851 = vmatprep.subr.mxu0 0.0
    %1852 = vmatpush1.msra.mxu0 %v1825
    %1853 = vmatprep.subr.mxu0 0.0
    %1854 = vmatpush1.msra.mxu0 %v1826
    %1855 = vmatprep.subr.mxu0 0.0
    %1856 = vmatpush1.msra.mxu0 %v1827
    %1857 = vmatprep.subr.mxu0 0.0
    %1858 = vmatpush1.msra.mxu0 %v1828
    %1859 = vmatprep.subr.mxu0 0.0
    %1860 = vmatpush1.msra.mxu0 %v1829
    %1861 = vmatprep.subr.mxu0 0.0
    %1862 = vmatpush1.msra.mxu0 0.0
    %1863 = vmatprep.subr.mxu0 0.0
    %1864 = vmatpush1.msra.mxu0 0.0
    %1865 = vmatprep.subr.mxu0 0.0
    %1866 = vmatpush1.msra.mxu0 0.0
    %1867 = vmatprep.subr.mxu0 0.0
    %1868 = vmatpush1.msra.mxu0 0.0
    %1869 = vmatprep.subr.mxu0 0.0
    %1870 = vmatpush1.msra.mxu0 0.0
    %1871 = vmatprep.subr.mxu0 0.0
    %1872 = vmatpush1.msra.mxu0 0.0
    %1873 = vmatprep.subr.mxu0 0.0
    %1874 = vmatpush1.msra.mxu0 0.0
    %1875 = vmatprep.subr.mxu0 0.0
    %1876 = vmatpush1.msra.mxu0 0.0
    %1877 = vmatprep.subr.mxu0 0.0
    %1878 = vmatpush1.msra.mxu0 0.0
    %1879 = vmatprep.subr.mxu0 0.0
    %1880 = vmatpush1.msra.mxu0 0.0
    %1881 = vmatprep.subr.mxu0 0.0
    %1882 = vmatpush1.msra.mxu0 0.0
    %1883 = vmatprep.subr.mxu0 0.0
    %1884 = vmatpush1.msra.mxu0 0.0
    %1885 = vmatprep.subr.mxu0 0.0
    %1886 = vmatpush1.msra.mxu0 0.0
    %1887 = vmatprep.subr.mxu0 0.0
    %1888 = vmatpush1.msra.mxu0 0.0
    %1889 = vmatprep.subr.mxu0 0.0
    %1890 = vmatpush1.msra.mxu0 0.0
    %1891 = vmatprep.subr.mxu0 0.0
    %1892 = vmatpush1.msra.mxu0 0.0
    %1893 = vmatprep.subr.mxu0 0.0
    %1894 = vmatpush1.msra.mxu0 0.0
    %1895 = vmatprep.subr.mxu0 0.0
    %1896 = vmatpush1.msra.mxu0 0.0
    %1897 = vmatprep.subr.mxu0 0.0
    %1898 = vmatpush1.msra.mxu0 0.0
    %1899 = vmatprep.subr.mxu0 0.0
    %1900 = vmatpush1.msra.mxu0 0.0
    %1901 = vmatprep.subr.mxu0 0.0
    %1902 = vmatpush1.msra.mxu0 0.0
    %1903 = vmatprep.subr.mxu0 0.0
    %1904 = vmatpush1.msra.mxu0 0.0
    %1905 = vmatprep.subr.mxu0 0.0
    %1906 = vmatpush1.msra.mxu0 0.0
    %1907 = vmatprep.subr.mxu0 0.0
    %1908 = vmatpush1.msra.mxu0 0.0
    %1909 = vmatprep.mubr.f32.mxu0 0.0
    %1910 = vmatmul.mubr.f32.gmra.mrb[0].mxu0 %v1834
    %v1911 = vpop.f32.mrb[0].mxu0
    %v1912 = vadd.f32 %v1830, %v1911
    %v1913 = vpop.f32.mrb[0].mxu0
    %1914 = vmatprep.mubr.f32.mxu0 0.0
    %1915 = vmatmul.mubr.f32.gmra.mrb[0].mxu0 %v1837
    %v1916 = vpop.f32.mrb[0].mxu0
    %v1917 = vadd.f32 %v1830, %v1916
    %v1918 = vpop.f32.mrb[0].mxu0
    %1919 = vmatprep.mubr.f32.mxu0 0.0
    %1920 = vmatmul.mubr.f32.gmra.mrb[0].mxu0 %v1840
    %v1921 = vpop.f32.mrb[0].mxu0
    %v1922 = vadd.f32 %v1830, %v1921
    %v1923 = vpop.f32.mrb[0].mxu0
    %1924 = vmatprep.mubr.f32.mxu0 0.0
    %1925 = vmatmul.mubr.f32.gmra.mrb[0].mxu0 %v1843
    %v1926 = vpop.f32.mrb[0].mxu0
    %v1927 = vadd.f32 %v1830, %v1926
    %v1928 = vpop.f32.mrb[0].mxu0
    %1929 = vdwg.mxu0
    %v1930 = vmax.f32 %v1912, 0.0
    %v1931 = vmax.f32 %v1917, 0.0
    %v1932 = vmax.f32 %v1922, 0.0
    %v1933 = vmax.f32 %v1927, 0.0
    %v1934 = vmul.f32 %v1930, %v1831
    %v1935 = vmul.f32 %v1931, %v1831
    %v1936 = vmul.f32 %v1932, %v1831
    %v1937 = vmul.f32 %v1933, %v1831
    %vm1938 = vcmask 261120
    %v1939 = vsel %vm1938, %v1934, 0.0
    %1940 = vadd.xlane.f32.xlu0 %v1939
    %v1941 = vpop.xlane.xlu0 %1940
    %v1942 = vsel %vm1938, %v1935, 0.0
    %1943 = vadd.xlane.f32.xlu0 %v1942
    %v1944 = vpop.xlane.xlu0 %1943
    %v1945 = vsel %vm1938, %v1936, 0.0
    %1946 = vadd.xlane.f32.xlu0 %v1945
    %v1947 = vpop.xlane.xlu0 %1946
    %v1948 = vsel %vm1938, %v1937, 0.0
    %1949 = vadd.xlane.f32.xlu0 %v1948
    %v1950 = vpop.xlane.xlu0 %1949
    %1952 = vset.pattern.permute.xlu0 0
    %1953 = vperm.xlu0 %1952, %v1832
    %v1954 = vpop.permute.xlu0 %1953
    %v1956 = vadd.f32 %v1941, %v1954
    %v1957 = vadd.f32 %v1944, %v1954
    %v1958 = vadd.f32 %v1947, %v1954
    %v1959 = vadd.f32 %v1950, %v1954
    %v1964 = vlaneseq
    %v1965 = vshrl.u32 %v1964, 7
    %v1966 = vsub.s32 %v32, %v1965
    %v1967 = vrot.slane %v1956, %v1966
    %v1968 = vadd.s32 %v32, 4294967288
    %v1969 = vlaneseq
    %v1970 = vshrl.u32 %v1969, 7
    %v1971 = vsub.s32 %v1968, %v1970
    %v1972 = vrot.slane %v1957, %v1971
    %vm1973 = vcmask 130112
    %v1974 = vsel %vm1973, %v1972, %v1967
    %v1975 = vlaneseq
    %v1976 = vshrl.u32 %v1975, 7
    %v1977 = vsub.s32 %v32, %v1976
    %v1978 = vrot.slane %v1958, %v1977
    %v1979 = vlaneseq
    %v1980 = vshrl.u32 %v1979, 7
    %v1981 = vsub.s32 %v1968, %v1980
    %v1982 = vrot.slane %v1959, %v1981
    %v1983 = vsel %vm1973, %v1982, %v1978
    %vm1984 = vcmask 1041409
    %v1985 = vsel %vm1984, %v1983, %v1974
    %vm1987 = vcmask 123904
    %1988 = vst.msk [vmem:[#allocation8] sm:$0x3] %vm1987, %v1985
    // Predicated region
    $region18: #{attention_xml_forward.1} parent=1 // pred_check
      _
    $region19: #{attention_xml_forward.1} parent=1 // pred_check_branch
      %1990 = sbr.rel (0) target = $region21
    $region20: #{attention_xml_forward.1} parent=1 // pred_region
      %s1992 = ssub.s32 32, 32
      %1993 = vsyncadd [#allocation7], %s1992
      %s1995 = sshll.u32 [#allocation8], 4
      %s1996 = int_to_ptr.vmem [resolvable:$true] %s1995
      %1998 = dma.vmem_to_hbm [thread:$0]  %s1996, 32, %s3, [#allocation7]
    $region21: #{attention_xml_forward.1} parent=1 // pred_fallthru
      _
    // Predicated region
    $region22: #{attention_xml_forward.1} parent=1 // pred_check
      _
    $region23: #{attention_xml_forward.1} parent=1 // pred_check_branch
      %2000 = sbr.rel (0) target = $region25
    $region24: #{attention_xml_forward.1} parent=1 // pred_region
      %2001 = dma.done [#allocation7], 32
    $region25: #{attention_xml_forward.1} parent=1 // pred_fallthru
      _
    %2002 = vsyncpa [#allocation6], 1
    %2003 = vsyncpa [#allocation7], 1

</llo_original>
